<compile_context>
chip_gen: v7x
topology: tpu7x:2x2x1
jax: 0.10.0
libtpu: 0.0.40
codegen_flags: <defaults>
</compile_context>

<pallas_src>
import numpy as np
import jax
import jax.numpy as jnp
from jax import lax
from jax.experimental import pallas as pl
from jax.experimental.pallas import tpu as pltpu

# ---------------- model hyperparameters (small, consistent with __init__) ----
NUM_JOINTS_IN = 4
IN_FEATURES = 2
NUM_JOINTS_OUT = 4
OUT_FEATURES = 3
HIDDEN_SIZE = 32
NUM_CELLS = 2
HEAD_LAYERS = (32, 16)
CAM_MAT_SHAPE = (3, 4)

D_IN = NUM_JOINTS_IN * IN_FEATURES + CAM_MAT_SHAPE[0] * CAM_MAT_SHAPE[1]  # 20
OUT_DIM = NUM_JOINTS_OUT * OUT_FEATURES                                   # 12
H = HIDDEN_SIZE
G = 4 * H            # 128 = gate width = lane width
SUBLANE = 8
D_PAD = 32           # padded input-feature dim (sublane-aligned K for layer 0)
N_MLP = len(HEAD_LAYERS) + 1


def _weight_layout():
    """Static row offsets & K-dims of the packed weight buffer:
    [ih0, hh0, ih1, hh1, ..., mlp0, mlp1, ...]."""
    rows = []
    for l in range(NUM_CELLS):
        rows.append(D_PAD if l == 0 else G)   # W_ih (K, 4H)
        rows.append(G)                        # W_hh (4H-padded, 4H)
    for _ in range(N_MLP):
        rows.append(G)
    offs = [0]
    for r in rows[:-1]:
        offs.append(offs[-1] + r)
    return tuple(offs), tuple(rows)


W_OFFS, W_ROWS = _weight_layout()
R_W = sum(W_ROWS)   # 800 rows x 128 lanes (bf16) ~= 200 KB, fully VMEM resident


# ------------------------------- Pallas kernel -------------------------------
def _make_kernel(T, BB, num_cells, n_mlp):
    def kernel(x_ref, w_ref, b_ref, out_ref):
        # Constant activation scale/offset vregs (hoisted): sigma via tanh.
        #   i/f/o lanes: act = 0.5*tanh(g) + 0.5   (weights pre-scaled by 0.5)
        #   g lanes    : act = tanh(g)
        lane = lax.broadcasted_iota(jnp.int32, (BB, G), 1)
        is_g = (lane >= 2 * H) & (lane < 3 * H)
        act_scale = jnp.where(is_g, jnp.float32(1.0), jnp.float32(0.5))
        act_off = jnp.where(is_g, jnp.float32(0.0), jnp.float32(0.5))

        def load_w(idx):  # static, aligned slices of the packed weight buffer
            return w_ref[pl.ds(W_OFFS[idx], W_ROWS[idx]), :]

        # Layer-0 input projection for the whole sequence: ONE batched matmul,
        # result stays register-resident (8 f32 vregs for (T*BB, 128)).
        w_ih0 = load_w(0)                                        # (D_PAD, 128) bf16
        gin0 = (jnp.dot(x_ref[...], w_ih0, preferred_element_type=jnp.float32)
                + b_ref[pl.ds(0, 1), :])                         # (T*BB, 128) f32
        gin = [gin0[t * BB:(t + 1) * BB, :] for t in range(T)]

        h = None
        for l in range(num_cells):
            w_hh = load_w(2 * l + 1)                             # (128, 128) bf16
            fuse_next = l + 1 < num_cells
            if fuse_next:
                w_ih_nxt = load_w(2 * (l + 1))                   # (128, 128) bf16
                b_nxt = jnp.broadcast_to(b_ref[pl.ds(l + 1, 1), :], (BB, G))

            # h/c are full-width (BB, 4H); only lanes [0, H) are "real".
            # Garbage in lanes >= H is harmless: every consumer (W_hh, next
            # layer's W_ih, MLP w0) has zero-padded rows beyond H.
            h = jnp.zeros((BB, G), jnp.float32)
            c = jnp.zeros((BB, G), jnp.float32)
            gin_next = []
            for t in range(T):  # T static & small -> fully unrolled
                gates = gin[t] + jnp.dot(h.astype(jnp.bfloat16), w_hh,
                                         preferred_element_type=jnp.float32)
                # Single tanh pass; PyTorch gate order on lanes: [i | f | g | o].
                act = jnp.tanh(gates) * act_scale + act_off
                f_g = pltpu.roll(act, 3 * H, 1)   # f -> lanes [0, H)  (XLU, free slot)
                g_g = pltpu.roll(act, 2 * H, 1)   # g -> lanes [0, H)
                o_g = pltpu.roll(act, H, 1)       # o -> lanes [0, H)
                c = f_g * c + act * g_g           # i is already at lanes [0, H)
                h = o_g * jnp.tanh(c)
                if fuse_next:
                    # Fused next-layer input projection (off this layer's
                    # serial chain; MXU is idle during the gate chain).
                    gin_next.append(
                        jnp.dot(h.astype(jnp.bfloat16), w_ih_nxt,
                                preferred_element_type=jnp.float32) + b_nxt)
            gin = gin_next

        # MLP head on last-timestep hidden state of the final LSTM layer.
        y = h
        for m in range(n_mlp):
            w = load_w(2 * num_cells + m)                # (128, 128) zero-padded
            bm = b_ref[pl.ds(num_cells + m, 1), :]       # (1, 128) zero-padded
            y = jnp.dot(y.astype(jnp.bfloat16), w,
                        preferred_element_type=jnp.float32) + bm
            if m < n_mlp - 1:
                y = jnp.where(y > 0, y, 0.01 * y)        # LeakyReLU(0.01); Dropout=id
        out_ref[...] = y

    return kernel


# ------------------------------- weight packing --------------------------------
def _pad2d(a, rows, cols):
    return jnp.pad(a, ((0, rows - a.shape[0]), (0, cols - a.shape[1])))


def pack_params(params):
    """Pack all weights into one (R_W, 128) bf16 buffer and one (8, 128) f32
    bias buffer.  Called ONCE (hoisted out of the forward hot path).
    i/f/o gate columns of W_ih / W_hh / bias are pre-scaled by 0.5 (exact) so
    the kernel can use the sigma(x) = 0.5*tanh(x/2) + 0.5 rewrite."""
    lane = jnp.arange(G)
    gate_scale = jnp.where((lane >= 2 * H) & (lane < 3 * H),
                           jnp.float32(1.0), jnp.float32(0.5))

    w_blocks, b_rows = [], []
    for l, (w_ih, w_hh, b) in enumerate(params["lstm"]):
        k_ih = D_PAD if l == 0 else G
        w_blocks.append(_pad2d(w_ih, k_ih, G) * gate_scale)
        w_blocks.append(_pad2d(w_hh, G, G) * gate_scale)
        b_rows.append(jnp.pad(b.reshape(-1), (0, G - b.size)) * gate_scale)
    for (w, b) in params["mlp"]:
        w_blocks.append(_pad2d(w, G, G))
        b_rows.append(jnp.pad(b.reshape(-1), (0, G - b.size)))

    wbuf = jnp.concatenate(w_blocks, axis=0).astype(jnp.bfloat16)      # (800, 128)
    n_b = len(b_rows)
    n_b_pad = ((n_b + SUBLANE - 1) // SUBLANE) * SUBLANE
    b_rows += [jnp.zeros((G,), jnp.float32)] * (n_b_pad - n_b)
    bbuf = jnp.stack(b_rows).astype(jnp.float32)                       # (8, 128)
    return jax.device_put(wbuf), jax.device_put(bbuf)


# ------------------------------- forward ---------------------------------------
@jax.jit
def coupled_lstm_forward(input_2d, input_cam, wbuf, bbuf):
    B, T, J, F = input_2d.shape
    assert J == NUM_JOINTS_IN and F == IN_FEATURES
    assert input_cam.shape == (B, T, CAM_MAT_SHAPE[0], CAM_MAT_SHAPE[1])
    BB = SUBLANE
    Bp = ((B + BB - 1) // BB) * BB       # pad batch to sublane quantum
    NB = Bp // BB                        # batch grid (shards across TCs on v7x)

    x = jnp.concatenate(
        [input_2d.reshape(B, T, J * F),
         input_cam.reshape(B, T, CAM_MAT_SHAPE[0] * CAM_MAT_SHAPE[1])],
        axis=-1,
    ).astype(jnp.float32)
    x = jnp.transpose(x, (1, 0, 2))                                  # (T, B, D)
    x = jnp.pad(x, ((0, 0), (0, Bp - B), (0, D_PAD - D_IN)))         # (T, Bp, Dp)
    # Batch-block-major layout so each grid step reads one contiguous slab.
    x = x.reshape(T, NB, BB, D_PAD).transpose(1, 0, 2, 3)            # (NB, T, BB, Dp)
    x = x.reshape(NB * T * BB, D_PAD).astype(jnp.bfloat16)

    kernel = _make_kernel(T, BB, NUM_CELLS, N_MLP)
    out = pl.pallas_call(
        kernel,
        out_shape=jax.ShapeDtypeStruct((Bp, G), jnp.float32),
        grid=(NB,),
        in_specs=[
            pl.BlockSpec((T * BB, D_PAD), lambda nb: (nb, 0)),
            pl.BlockSpec((R_W, G), lambda nb: (0, 0)),        # weights stay resident
            pl.BlockSpec((SUBLANE, G), lambda nb: (0, 0)),    # biases stay resident
        ],
        out_specs=pl.BlockSpec((BB, G), lambda nb: (nb, 0)),
        compiler_params=pltpu.CompilerParams(dimension_semantics=("parallel",)),
    )(x, wbuf, bbuf)
    return out[:B, :OUT_DIM].reshape(B, 1, NUM_JOINTS_OUT, OUT_FEATURES)


# ------------------------- deterministic parameter init -----------------------
def init_params(key):
    kk = 1.0 / np.sqrt(H)
    lstm, mlp = [], []
    n_keys = NUM_CELLS * 4 + (len(HEAD_LAYERS) + 1) * 2
    keys = list(jax.random.split(key, n_keys))

    def nxt():
        return keys.pop(0)

    # LSTM layers: PyTorch stores weight_ih (4H, in), weight_hh (4H, H); transpose.
    for l in range(NUM_CELLS):
        d_in = D_IN if l == 0 else H
        w_ih = jax.random.uniform(nxt(), (4 * H, d_in), jnp.float32, -kk, kk).T
        w_hh = jax.random.uniform(nxt(), (4 * H, H), jnp.float32, -kk, kk).T
        b_ih = jax.random.uniform(nxt(), (4 * H,), jnp.float32, -kk, kk)
        b_hh = jax.random.uniform(nxt(), (4 * H,), jnp.float32, -kk, kk)
        lstm.append((w_ih, w_hh, (b_ih + b_hh).reshape(1, 4 * H)))

    # MLP head: Linear(H, head[0]) ... Linear(head[-1], OUT_DIM)
    dims = [H] + list(HEAD_LAYERS) + [OUT_DIM]
    for i in range(len(dims) - 1):
        fan_in, fan_out = dims[i], dims[i + 1]
        bound = 1.0 / np.sqrt(fan_in)
        w = jax.random.uniform(nxt(), (fan_out, fan_in), jnp.float32, -bound, bound).T
        b = jax.random.uniform(nxt(), (fan_out,), jnp.float32, -bound, bound).reshape(1, fan_out)
        mlp.append((w, b))

    return {"lstm": lstm, "mlp": mlp}


# ------------------------- pure-JAX reference (f32, for checking) -------------
def reference_forward(input_2d, input_cam, params):
    B, T, J, F = input_2d.shape
    x = jnp.concatenate(
        [input_2d.reshape(B, T, J * F), input_cam.reshape(B, T, 12)], axis=-1
    ).astype(jnp.float32)
    seq = x
    for (w_ih, w_hh, b) in params["lstm"]:
        h = jnp.zeros((B, H), jnp.float32)
        c = jnp.zeros((B, H), jnp.float32)
        outs = []
        for t in range(T):
            gates = seq[:, t, :] @ w_ih + h @ w_hh + b
            i_g = jax.nn.sigmoid(gates[:, :H])
            f_g = jax.nn.sigmoid(gates[:, H:2 * H])
            g_g = jnp.tanh(gates[:, 2 * H:3 * H])
            o_g = jax.nn.sigmoid(gates[:, 3 * H:])
            c = f_g * c + i_g * g_g
            h = o_g * jnp.tanh(c)
            outs.append(h)
        seq = jnp.stack(outs, axis=1)
    y = seq[:, -1, :]
    ps = params["mlp"]
    for li, (w, b) in enumerate(ps):
        y = y @ w + b
        if li < len(ps) - 1:
            y = jnp.where(y > 0, y, 0.01 * y)
    return y.reshape(B, 1, NUM_JOINTS_OUT, OUT_FEATURES)


# ----------------------------------- main --------------------------------------
if __name__ == "__main__":
    B, T = 2, 8
    key = jax.random.PRNGKey(0)
    k_in2d, k_incam, k_par = jax.random.split(key, 3)
    input_2d = jax.random.normal(k_in2d, (B, T, NUM_JOINTS_IN, IN_FEATURES), jnp.float32)
    input_cam = jax.random.normal(k_incam, (B, T, CAM_MAT_SHAPE[0], CAM_MAT_SHAPE[1]), jnp.float32)
    params = init_params(k_par)

    # Weights packed ONCE, outside the forward hot path.
    wbuf, bbuf = pack_params(params)

    out = coupled_lstm_forward(input_2d, input_cam, wbuf, bbuf)
    out = jax.block_until_ready(out)
    assert out.shape == (B, 1, NUM_JOINTS_OUT, OUT_FEATURES)

    ref = jax.block_until_ready(reference_forward(input_2d, input_cam, params))
    # bf16 MXU operands (with f32 accumulation) introduce ~1e-2-level relative
    # error vs. the pure-f32 reference; 2e-2 tolerance validates semantics.
    np.testing.assert_allclose(np.asarray(out), np.asarray(ref), rtol=2e-2, atol=2e-2)

    print("KERNEL_OK")
</pallas_src>

<mosaic_0001>
module attributes {stable_mosaic.version = 11 : i64} {
  func.func @kernel(%arg0: i32, %arg1: memref<64x32xbf16, #tpu.memory_space<vmem>>, %arg2: memref<800x128xbf16, #tpu.memory_space<vmem>>, %arg3: memref<8x128xf32, #tpu.memory_space<vmem>>, %arg4: memref<8x128xf32, #tpu.memory_space<vmem>>) attributes {dimension_semantics = [#tpu.dimension_semantics<parallel>], iteration_bounds = array<i64: 1>, scalar_prefetch = 0 : i64, scratch_operands = 0 : i64, tpu.core_type = #tpu.core_type<tc>, window_params = [{transform_indices = @transform_0, window_bounds = array<i64: 64, 32>}, {pipeline_mode = #tpu.pipeline_mode<synchronous>, transform_indices = @transform_1, window_bounds = array<i64: 800, 128>}, {pipeline_mode = #tpu.pipeline_mode<synchronous>, transform_indices = @transform_2, window_bounds = array<i64: 8, 128>}, {transform_indices = @transform_3, window_bounds = array<i64: 8, 128>}]} {
    %0 = tpu.iota {dimensions = array<i32: 1>} : vector<8x128xi32>
    %c64_i32 = arith.constant 64 : i32
    %1 = vector.broadcast %c64_i32 : i32 to vector<8x128xi32>
    %2 = arith.cmpi sge, %0, %1 : vector<8x128xi32>
    %c96_i32 = arith.constant 96 : i32
    %3 = vector.broadcast %c96_i32 : i32 to vector<8x128xi32>
    %4 = arith.cmpi slt, %0, %3 : vector<8x128xi32>
    %5 = arith.andi %2, %4 : vector<8x128xi1>
    %cst = arith.constant 1.000000e+00 : f32
    %cst_0 = arith.constant 5.000000e-01 : f32
    %6 = vector.broadcast %cst : f32 to vector<8x128xf32>
    %7 = vector.broadcast %cst_0 : f32 to vector<8x128xf32>
    %8 = arith.select %5, %6, %7 : vector<8x128xi1>, vector<8x128xf32>
    %cst_1 = arith.constant 0.000000e+00 : f32
    %cst_2 = arith.constant 5.000000e-01 : f32
    %9 = vector.broadcast %cst_1 : f32 to vector<8x128xf32>
    %10 = vector.broadcast %cst_2 : f32 to vector<8x128xf32>
    %11 = arith.select %5, %9, %10 : vector<8x128xi1>, vector<8x128xf32>
    %c0 = arith.constant 0 : index
    %c0_3 = arith.constant 0 : index
    %12 = vector.load %arg2[%c0, %c0_3] : memref<800x128xbf16, #tpu.memory_space<vmem>>, vector<32x128xbf16>
    %c0_4 = arith.constant 0 : index
    %c0_5 = arith.constant 0 : index
    %13 = vector.load %arg1[%c0_4, %c0_5] : memref<64x32xbf16, #tpu.memory_space<vmem>>, vector<64x32xbf16>
    %cst_6 = arith.constant dense<0.000000e+00> : vector<64x128xf32>
    %14 = tpu.matmul %13, %12, %cst_6 {dimension_numbers = #tpu.dot_dimension_numbers<[1], [0], [0], [1], [0, 0, 1, 1], [], []>} : vector<64x32xbf16>, vector<32x128xbf16>, vector<64x128xf32> -> vector<64x128xf32>
    %c0_7 = arith.constant 0 : index
    %c0_8 = arith.constant 0 : index
    %15 = vector.load %arg3[%c0_7, %c0_8] : memref<8x128xf32, #tpu.memory_space<vmem>>, vector<1x128xf32>
    %16 = vector.broadcast %15 : vector<1x128xf32> to vector<64x128xf32>
    %17 = arith.addf %14, %16 : vector<64x128xf32>
    %18 = vector.extract_strided_slice %17 {offsets = [0, 0], sizes = [8, 128], strides = [1, 1]} : vector<64x128xf32> to vector<8x128xf32>
    %19 = vector.extract_strided_slice %17 {offsets = [8, 0], sizes = [8, 128], strides = [1, 1]} : vector<64x128xf32> to vector<8x128xf32>
    %20 = vector.extract_strided_slice %17 {offsets = [16, 0], sizes = [8, 128], strides = [1, 1]} : vector<64x128xf32> to vector<8x128xf32>
    %21 = vector.extract_strided_slice %17 {offsets = [24, 0], sizes = [8, 128], strides = [1, 1]} : vector<64x128xf32> to vector<8x128xf32>
    %22 = vector.extract_strided_slice %17 {offsets = [32, 0], sizes = [8, 128], strides = [1, 1]} : vector<64x128xf32> to vector<8x128xf32>
    %23 = vector.extract_strided_slice %17 {offsets = [40, 0], sizes = [8, 128], strides = [1, 1]} : vector<64x128xf32> to vector<8x128xf32>
    %24 = vector.extract_strided_slice %17 {offsets = [48, 0], sizes = [8, 128], strides = [1, 1]} : vector<64x128xf32> to vector<8x128xf32>
    %25 = vector.extract_strided_slice %17 {offsets = [56, 0], sizes = [8, 128], strides = [1, 1]} : vector<64x128xf32> to vector<8x128xf32>
    %c32 = arith.constant 32 : index
    %c0_9 = arith.constant 0 : index
    %26 = vector.load %arg2[%c32, %c0_9] : memref<800x128xbf16, #tpu.memory_space<vmem>>, vector<128x128xbf16>
    %c160 = arith.constant 160 : index
    %c0_10 = arith.constant 0 : index
    %27 = vector.load %arg2[%c160, %c0_10] : memref<800x128xbf16, #tpu.memory_space<vmem>>, vector<128x128xbf16>
    %c1 = arith.constant 1 : index
    %c0_11 = arith.constant 0 : index
    %28 = vector.load %arg3[%c1, %c0_11] : memref<8x128xf32, #tpu.memory_space<vmem>>, vector<1x128xf32>
    %29 = vector.shape_cast %28 : vector<1x128xf32> to vector<1x128xf32>
    %30 = vector.broadcast %29 : vector<1x128xf32> to vector<8x128xf32>
    %cst_12 = arith.constant 0.000000e+00 : f32
    %31 = vector.broadcast %cst_12 : f32 to vector<8x128xf32>
    %cst_13 = arith.constant 0.000000e+00 : f32
    %32 = vector.broadcast %cst_13 : f32 to vector<8x128xf32>
    %33 = arith.truncf %31 : vector<8x128xf32> to vector<8x128xbf16>
    %cst_14 = arith.constant dense<0.000000e+00> : vector<8x128xf32>
    %34 = tpu.matmul %33, %26, %cst_14 {dimension_numbers = #tpu.dot_dimension_numbers<[1], [0], [0], [1], [0, 0, 1, 1], [], []>} : vector<8x128xbf16>, vector<128x128xbf16>, vector<8x128xf32> -> vector<8x128xf32>
    %35 = arith.addf %18, %34 : vector<8x128xf32>
    %36 = math.tanh %35 : vector<8x128xf32>
    %37 = arith.mulf %36, %8 : vector<8x128xf32>
    %38 = arith.addf %37, %11 : vector<8x128xf32>
    %c96_i32_15 = arith.constant 96 : i32
    %39 = tpu.dynamic_rotate %38 by %c96_i32_15 dim 1 : vector<8x128xf32>, i32 -> vector<8x128xf32>
    %c64_i32_16 = arith.constant 64 : i32
    %40 = tpu.dynamic_rotate %38 by %c64_i32_16 dim 1 : vector<8x128xf32>, i32 -> vector<8x128xf32>
    %c32_i32 = arith.constant 32 : i32
    %41 = tpu.dynamic_rotate %38 by %c32_i32 dim 1 : vector<8x128xf32>, i32 -> vector<8x128xf32>
    %42 = arith.mulf %39, %32 : vector<8x128xf32>
    %43 = arith.mulf %38, %40 : vector<8x128xf32>
    %44 = arith.addf %42, %43 : vector<8x128xf32>
    %45 = math.tanh %44 : vector<8x128xf32>
    %46 = arith.mulf %41, %45 : vector<8x128xf32>
    %47 = arith.truncf %46 : vector<8x128xf32> to vector<8x128xbf16>
    %cst_17 = arith.constant dense<0.000000e+00> : vector<8x128xf32>
    %48 = tpu.matmul %47, %27, %cst_17 {dimension_numbers = #tpu.dot_dimension_numbers<[1], [0], [0], [1], [0, 0, 1, 1], [], []>} : vector<8x128xbf16>, vector<128x128xbf16>, vector<8x128xf32> -> vector<8x128xf32>
    %49 = arith.addf %48, %30 : vector<8x128xf32>
    %50 = arith.truncf %46 : vector<8x128xf32> to vector<8x128xbf16>
    %cst_18 = arith.constant dense<0.000000e+00> : vector<8x128xf32>
    %51 = tpu.matmul %50, %26, %cst_18 {dimension_numbers = #tpu.dot_dimension_numbers<[1], [0], [0], [1], [0, 0, 1, 1], [], []>} : vector<8x128xbf16>, vector<128x128xbf16>, vector<8x128xf32> -> vector<8x128xf32>
    %52 = arith.addf %19, %51 : vector<8x128xf32>
    %53 = math.tanh %52 : vector<8x128xf32>
    %54 = arith.mulf %53, %8 : vector<8x128xf32>
    %55 = arith.addf %54, %11 : vector<8x128xf32>
    %c96_i32_19 = arith.constant 96 : i32
    %56 = tpu.dynamic_rotate %55 by %c96_i32_19 dim 1 : vector<8x128xf32>, i32 -> vector<8x128xf32>
    %c64_i32_20 = arith.constant 64 : i32
    %57 = tpu.dynamic_rotate %55 by %c64_i32_20 dim 1 : vector<8x128xf32>, i32 -> vector<8x128xf32>
    %c32_i32_21 = arith.constant 32 : i32
    %58 = tpu.dynamic_rotate %55 by %c32_i32_21 dim 1 : vector<8x128xf32>, i32 -> vector<8x128xf32>
    %59 = arith.mulf %56, %44 : vector<8x128xf32>
    %60 = arith.mulf %55, %57 : vector<8x128xf32>
    %61 = arith.addf %59, %60 : vector<8x128xf32>
    %62 = math.tanh %61 : vector<8x128xf32>
    %63 = arith.mulf %58, %62 : vector<8x128xf32>
    %64 = arith.truncf %63 : vector<8x128xf32> to vector<8x128xbf16>
    %cst_22 = arith.constant dense<0.000000e+00> : vector<8x128xf32>
    %65 = tpu.matmul %64, %27, %cst_22 {dimension_numbers = #tpu.dot_dimension_numbers<[1], [0], [0], [1], [0, 0, 1, 1], [], []>} : vector<8x128xbf16>, vector<128x128xbf16>, vector<8x128xf32> -> vector<8x128xf32>
    %66 = arith.addf %65, %30 : vector<8x128xf32>
    %67 = arith.truncf %63 : vector<8x128xf32> to vector<8x128xbf16>
    %cst_23 = arith.constant dense<0.000000e+00> : vector<8x128xf32>
    %68 = tpu.matmul %67, %26, %cst_23 {dimension_numbers = #tpu.dot_dimension_numbers<[1], [0], [0], [1], [0, 0, 1, 1], [], []>} : vector<8x128xbf16>, vector<128x128xbf16>, vector<8x128xf32> -> vector<8x128xf32>
    %69 = arith.addf %20, %68 : vector<8x128xf32>
    %70 = math.tanh %69 : vector<8x128xf32>
    %71 = arith.mulf %70, %8 : vector<8x128xf32>
    %72 = arith.addf %71, %11 : vector<8x128xf32>
    %c96_i32_24 = arith.constant 96 : i32
    %73 = tpu.dynamic_rotate %72 by %c96_i32_24 dim 1 : vector<8x128xf32>, i32 -> vector<8x128xf32>
    %c64_i32_25 = arith.constant 64 : i32
    %74 = tpu.dynamic_rotate %72 by %c64_i32_25 dim 1 : vector<8x128xf32>, i32 -> vector<8x128xf32>
    %c32_i32_26 = arith.constant 32 : i32
    %75 = tpu.dynamic_rotate %72 by %c32_i32_26 dim 1 : vector<8x128xf32>, i32 -> vector<8x128xf32>
    %76 = arith.mulf %73, %61 : vector<8x128xf32>
    %77 = arith.mulf %72, %74 : vector<8x128xf32>
    %78 = arith.addf %76, %77 : vector<8x128xf32>
    %79 = math.tanh %78 : vector<8x128xf32>
    %80 = arith.mulf %75, %79 : vector<8x128xf32>
    %81 = arith.truncf %80 : vector<8x128xf32> to vector<8x128xbf16>
    %cst_27 = arith.constant dense<0.000000e+00> : vector<8x128xf32>
    %82 = tpu.matmul %81, %27, %cst_27 {dimension_numbers = #tpu.dot_dimension_numbers<[1], [0], [0], [1], [0, 0, 1, 1], [], []>} : vector<8x128xbf16>, vector<128x128xbf16>, vector<8x128xf32> -> vector<8x128xf32>
    %83 = arith.addf %82, %30 : vector<8x128xf32>
    %84 = arith.truncf %80 : vector<8x128xf32> to vector<8x128xbf16>
    %cst_28 = arith.constant dense<0.000000e+00> : vector<8x128xf32>
    %85 = tpu.matmul %84, %26, %cst_28 {dimension_numbers = #tpu.dot_dimension_numbers<[1], [0], [0], [1], [0, 0, 1, 1], [], []>} : vector<8x128xbf16>, vector<128x128xbf16>, vector<8x128xf32> -> vector<8x128xf32>
    %86 = arith.addf %21, %85 : vector<8x128xf32>
    %87 = math.tanh %86 : vector<8x128xf32>
    %88 = arith.mulf %87, %8 : vector<8x128xf32>
    %89 = arith.addf %88, %11 : vector<8x128xf32>
    %c96_i32_29 = arith.constant 96 : i32
    %90 = tpu.dynamic_rotate %89 by %c96_i32_29 dim 1 : vector<8x128xf32>, i32 -> vector<8x128xf32>
    %c64_i32_30 = arith.constant 64 : i32
    %91 = tpu.dynamic_rotate %89 by %c64_i32_30 dim 1 : vector<8x128xf32>, i32 -> vector<8x128xf32>
    %c32_i32_31 = arith.constant 32 : i32
    %92 = tpu.dynamic_rotate %89 by %c32_i32_31 dim 1 : vector<8x128xf32>, i32 -> vector<8x128xf32>
    %93 = arith.mulf %90, %78 : vector<8x128xf32>
    %94 = arith.mulf %89, %91 : vector<8x128xf32>
    %95 = arith.addf %93, %94 : vector<8x128xf32>
    %96 = math.tanh %95 : vector<8x128xf32>
    %97 = arith.mulf %92, %96 : vector<8x128xf32>
    %98 = arith.truncf %97 : vector<8x128xf32> to vector<8x128xbf16>
    %cst_32 = arith.constant dense<0.000000e+00> : vector<8x128xf32>
    %99 = tpu.matmul %98, %27, %cst_32 {dimension_numbers = #tpu.dot_dimension_numbers<[1], [0], [0], [1], [0, 0, 1, 1], [], []>} : vector<8x128xbf16>, vector<128x128xbf16>, vector<8x128xf32> -> vector<8x128xf32>
    %100 = arith.addf %99, %30 : vector<8x128xf32>
    %101 = arith.truncf %97 : vector<8x128xf32> to vector<8x128xbf16>
    %cst_33 = arith.constant dense<0.000000e+00> : vector<8x128xf32>
    %102 = tpu.matmul %101, %26, %cst_33 {dimension_numbers = #tpu.dot_dimension_numbers<[1], [0], [0], [1], [0, 0, 1, 1], [], []>} : vector<8x128xbf16>, vector<128x128xbf16>, vector<8x128xf32> -> vector<8x128xf32>
    %103 = arith.addf %22, %102 : vector<8x128xf32>
    %104 = math.tanh %103 : vector<8x128xf32>
    %105 = arith.mulf %104, %8 : vector<8x128xf32>
    %106 = arith.addf %105, %11 : vector<8x128xf32>
    %c96_i32_34 = arith.constant 96 : i32
    %107 = tpu.dynamic_rotate %106 by %c96_i32_34 dim 1 : vector<8x128xf32>, i32 -> vector<8x128xf32>
    %c64_i32_35 = arith.constant 64 : i32
    %108 = tpu.dynamic_rotate %106 by %c64_i32_35 dim 1 : vector<8x128xf32>, i32 -> vector<8x128xf32>
    %c32_i32_36 = arith.constant 32 : i32
    %109 = tpu.dynamic_rotate %106 by %c32_i32_36 dim 1 : vector<8x128xf32>, i32 -> vector<8x128xf32>
    %110 = arith.mulf %107, %95 : vector<8x128xf32>
    %111 = arith.mulf %106, %108 : vector<8x128xf32>
    %112 = arith.addf %110, %111 : vector<8x128xf32>
    %113 = math.tanh %112 : vector<8x128xf32>
    %114 = arith.mulf %109, %113 : vector<8x128xf32>
    %115 = arith.truncf %114 : vector<8x128xf32> to vector<8x128xbf16>
    %cst_37 = arith.constant dense<0.000000e+00> : vector<8x128xf32>
    %116 = tpu.matmul %115, %27, %cst_37 {dimension_numbers = #tpu.dot_dimension_numbers<[1], [0], [0], [1], [0, 0, 1, 1], [], []>} : vector<8x128xbf16>, vector<128x128xbf16>, vector<8x128xf32> -> vector<8x128xf32>
    %117 = arith.addf %116, %30 : vector<8x128xf32>
    %118 = arith.truncf %114 : vector<8x128xf32> to vector<8x128xbf16>
    %cst_38 = arith.constant dense<0.000000e+00> : vector<8x128xf32>
    %119 = tpu.matmul %118, %26, %cst_38 {dimension_numbers = #tpu.dot_dimension_numbers<[1], [0], [0], [1], [0, 0, 1, 1], [], []>} : vector<8x128xbf16>, vector<128x128xbf16>, vector<8x128xf32> -> vector<8x128xf32>
    %120 = arith.addf %23, %119 : vector<8x128xf32>
    %121 = math.tanh %120 : vector<8x128xf32>
    %122 = arith.mulf %121, %8 : vector<8x128xf32>
    %123 = arith.addf %122, %11 : vector<8x128xf32>
    %c96_i32_39 = arith.constant 96 : i32
    %124 = tpu.dynamic_rotate %123 by %c96_i32_39 dim 1 : vector<8x128xf32>, i32 -> vector<8x128xf32>
    %c64_i32_40 = arith.constant 64 : i32
    %125 = tpu.dynamic_rotate %123 by %c64_i32_40 dim 1 : vector<8x128xf32>, i32 -> vector<8x128xf32>
    %c32_i32_41 = arith.constant 32 : i32
    %126 = tpu.dynamic_rotate %123 by %c32_i32_41 dim 1 : vector<8x128xf32>, i32 -> vector<8x128xf32>
    %127 = arith.mulf %124, %112 : vector<8x128xf32>
    %128 = arith.mulf %123, %125 : vector<8x128xf32>
    %129 = arith.addf %127, %128 : vector<8x128xf32>
    %130 = math.tanh %129 : vector<8x128xf32>
    %131 = arith.mulf %126, %130 : vector<8x128xf32>
    %132 = arith.truncf %131 : vector<8x128xf32> to vector<8x128xbf16>
    %cst_42 = arith.constant dense<0.000000e+00> : vector<8x128xf32>
    %133 = tpu.matmul %132, %27, %cst_42 {dimension_numbers = #tpu.dot_dimension_numbers<[1], [0], [0], [1], [0, 0, 1, 1], [], []>} : vector<8x128xbf16>, vector<128x128xbf16>, vector<8x128xf32> -> vector<8x128xf32>
    %134 = arith.addf %133, %30 : vector<8x128xf32>
    %135 = arith.truncf %131 : vector<8x128xf32> to vector<8x128xbf16>
    %cst_43 = arith.constant dense<0.000000e+00> : vector<8x128xf32>
    %136 = tpu.matmul %135, %26, %cst_43 {dimension_numbers = #tpu.dot_dimension_numbers<[1], [0], [0], [1], [0, 0, 1, 1], [], []>} : vector<8x128xbf16>, vector<128x128xbf16>, vector<8x128xf32> -> vector<8x128xf32>
    %137 = arith.addf %24, %136 : vector<8x128xf32>
    %138 = math.tanh %137 : vector<8x128xf32>
    %139 = arith.mulf %138, %8 : vector<8x128xf32>
    %140 = arith.addf %139, %11 : vector<8x128xf32>
    %c96_i32_44 = arith.constant 96 : i32
    %141 = tpu.dynamic_rotate %140 by %c96_i32_44 dim 1 : vector<8x128xf32>, i32 -> vector<8x128xf32>
    %c64_i32_45 = arith.constant 64 : i32
    %142 = tpu.dynamic_rotate %140 by %c64_i32_45 dim 1 : vector<8x128xf32>, i32 -> vector<8x128xf32>
    %c32_i32_46 = arith.constant 32 : i32
    %143 = tpu.dynamic_rotate %140 by %c32_i32_46 dim 1 : vector<8x128xf32>, i32 -> vector<8x128xf32>
    %144 = arith.mulf %141, %129 : vector<8x128xf32>
    %145 = arith.mulf %140, %142 : vector<8x128xf32>
    %146 = arith.addf %144, %145 : vector<8x128xf32>
    %147 = math.tanh %146 : vector<8x128xf32>
    %148 = arith.mulf %143, %147 : vector<8x128xf32>
    %149 = arith.truncf %148 : vector<8x128xf32> to vector<8x128xbf16>
    %cst_47 = arith.constant dense<0.000000e+00> : vector<8x128xf32>
    %150 = tpu.matmul %149, %27, %cst_47 {dimension_numbers = #tpu.dot_dimension_numbers<[1], [0], [0], [1], [0, 0, 1, 1], [], []>} : vector<8x128xbf16>, vector<128x128xbf16>, vector<8x128xf32> -> vector<8x128xf32>
    %151 = arith.addf %150, %30 : vector<8x128xf32>
    %152 = arith.truncf %148 : vector<8x128xf32> to vector<8x128xbf16>
    %cst_48 = arith.constant dense<0.000000e+00> : vector<8x128xf32>
    %153 = tpu.matmul %152, %26, %cst_48 {dimension_numbers = #tpu.dot_dimension_numbers<[1], [0], [0], [1], [0, 0, 1, 1], [], []>} : vector<8x128xbf16>, vector<128x128xbf16>, vector<8x128xf32> -> vector<8x128xf32>
    %154 = arith.addf %25, %153 : vector<8x128xf32>
    %155 = math.tanh %154 : vector<8x128xf32>
    %156 = arith.mulf %155, %8 : vector<8x128xf32>
    %157 = arith.addf %156, %11 : vector<8x128xf32>
    %c96_i32_49 = arith.constant 96 : i32
    %158 = tpu.dynamic_rotate %157 by %c96_i32_49 dim 1 : vector<8x128xf32>, i32 -> vector<8x128xf32>
    %c64_i32_50 = arith.constant 64 : i32
    %159 = tpu.dynamic_rotate %157 by %c64_i32_50 dim 1 : vector<8x128xf32>, i32 -> vector<8x128xf32>
    %c32_i32_51 = arith.constant 32 : i32
    %160 = tpu.dynamic_rotate %157 by %c32_i32_51 dim 1 : vector<8x128xf32>, i32 -> vector<8x128xf32>
    %161 = arith.mulf %158, %146 : vector<8x128xf32>
    %162 = arith.mulf %157, %159 : vector<8x128xf32>
    %163 = arith.addf %161, %162 : vector<8x128xf32>
    %164 = math.tanh %163 : vector<8x128xf32>
    %165 = arith.mulf %160, %164 : vector<8x128xf32>
    %166 = arith.truncf %165 : vector<8x128xf32> to vector<8x128xbf16>
    %cst_52 = arith.constant dense<0.000000e+00> : vector<8x128xf32>
    %167 = tpu.matmul %166, %27, %cst_52 {dimension_numbers = #tpu.dot_dimension_numbers<[1], [0], [0], [1], [0, 0, 1, 1], [], []>} : vector<8x128xbf16>, vector<128x128xbf16>, vector<8x128xf32> -> vector<8x128xf32>
    %168 = arith.addf %167, %30 : vector<8x128xf32>
    %c288 = arith.constant 288 : index
    %c0_53 = arith.constant 0 : index
    %169 = vector.load %arg2[%c288, %c0_53] : memref<800x128xbf16, #tpu.memory_space<vmem>>, vector<128x128xbf16>
    %cst_54 = arith.constant 0.000000e+00 : f32
    %170 = vector.broadcast %cst_54 : f32 to vector<8x128xf32>
    %cst_55 = arith.constant 0.000000e+00 : f32
    %171 = vector.broadcast %cst_55 : f32 to vector<8x128xf32>
    %172 = arith.truncf %170 : vector<8x128xf32> to vector<8x128xbf16>
    %cst_56 = arith.constant dense<0.000000e+00> : vector<8x128xf32>
    %173 = tpu.matmul %172, %169, %cst_56 {dimension_numbers = #tpu.dot_dimension_numbers<[1], [0], [0], [1], [0, 0, 1, 1], [], []>} : vector<8x128xbf16>, vector<128x128xbf16>, vector<8x128xf32> -> vector<8x128xf32>
    %174 = arith.addf %49, %173 : vector<8x128xf32>
    %175 = math.tanh %174 : vector<8x128xf32>
    %176 = arith.mulf %175, %8 : vector<8x128xf32>
    %177 = arith.addf %176, %11 : vector<8x128xf32>
    %c96_i32_57 = arith.constant 96 : i32
    %178 = tpu.dynamic_rotate %177 by %c96_i32_57 dim 1 : vector<8x128xf32>, i32 -> vector<8x128xf32>
    %c64_i32_58 = arith.constant 64 : i32
    %179 = tpu.dynamic_rotate %177 by %c64_i32_58 dim 1 : vector<8x128xf32>, i32 -> vector<8x128xf32>
    %c32_i32_59 = arith.constant 32 : i32
    %180 = tpu.dynamic_rotate %177 by %c32_i32_59 dim 1 : vector<8x128xf32>, i32 -> vector<8x128xf32>
    %181 = arith.mulf %178, %171 : vector<8x128xf32>
    %182 = arith.mulf %177, %179 : vector<8x128xf32>
    %183 = arith.addf %181, %182 : vector<8x128xf32>
    %184 = math.tanh %183 : vector<8x128xf32>
    %185 = arith.mulf %180, %184 : vector<8x128xf32>
    %186 = arith.truncf %185 : vector<8x128xf32> to vector<8x128xbf16>
    %cst_60 = arith.constant dense<0.000000e+00> : vector<8x128xf32>
    %187 = tpu.matmul %186, %169, %cst_60 {dimension_numbers = #tpu.dot_dimension_numbers<[1], [0], [0], [1], [0, 0, 1, 1], [], []>} : vector<8x128xbf16>, vector<128x128xbf16>, vector<8x128xf32> -> vector<8x128xf32>
    %188 = arith.addf %66, %187 : vector<8x128xf32>
    %189 = math.tanh %188 : vector<8x128xf32>
    %190 = arith.mulf %189, %8 : vector<8x128xf32>
    %191 = arith.addf %190, %11 : vector<8x128xf32>
    %c96_i32_61 = arith.constant 96 : i32
    %192 = tpu.dynamic_rotate %191 by %c96_i32_61 dim 1 : vector<8x128xf32>, i32 -> vector<8x128xf32>
    %c64_i32_62 = arith.constant 64 : i32
    %193 = tpu.dynamic_rotate %191 by %c64_i32_62 dim 1 : vector<8x128xf32>, i32 -> vector<8x128xf32>
    %c32_i32_63 = arith.constant 32 : i32
    %194 = tpu.dynamic_rotate %191 by %c32_i32_63 dim 1 : vector<8x128xf32>, i32 -> vector<8x128xf32>
    %195 = arith.mulf %192, %183 : vector<8x128xf32>
    %196 = arith.mulf %191, %193 : vector<8x128xf32>
    %197 = arith.addf %195, %196 : vector<8x128xf32>
    %198 = math.tanh %197 : vector<8x128xf32>
    %199 = arith.mulf %194, %198 : vector<8x128xf32>
    %200 = arith.truncf %199 : vector<8x128xf32> to vector<8x128xbf16>
    %cst_64 = arith.constant dense<0.000000e+00> : vector<8x128xf32>
    %201 = tpu.matmul %200, %169, %cst_64 {dimension_numbers = #tpu.dot_dimension_numbers<[1], [0], [0], [1], [0, 0, 1, 1], [], []>} : vector<8x128xbf16>, vector<128x128xbf16>, vector<8x128xf32> -> vector<8x128xf32>
    %202 = arith.addf %83, %201 : vector<8x128xf32>
    %203 = math.tanh %202 : vector<8x128xf32>
    %204 = arith.mulf %203, %8 : vector<8x128xf32>
    %205 = arith.addf %204, %11 : vector<8x128xf32>
    %c96_i32_65 = arith.constant 96 : i32
    %206 = tpu.dynamic_rotate %205 by %c96_i32_65 dim 1 : vector<8x128xf32>, i32 -> vector<8x128xf32>
    %c64_i32_66 = arith.constant 64 : i32
    %207 = tpu.dynamic_rotate %205 by %c64_i32_66 dim 1 : vector<8x128xf32>, i32 -> vector<8x128xf32>
    %c32_i32_67 = arith.constant 32 : i32
    %208 = tpu.dynamic_rotate %205 by %c32_i32_67 dim 1 : vector<8x128xf32>, i32 -> vector<8x128xf32>
    %209 = arith.mulf %206, %197 : vector<8x128xf32>
    %210 = arith.mulf %205, %207 : vector<8x128xf32>
    %211 = arith.addf %209, %210 : vector<8x128xf32>
    %212 = math.tanh %211 : vector<8x128xf32>
    %213 = arith.mulf %208, %212 : vector<8x128xf32>
    %214 = arith.truncf %213 : vector<8x128xf32> to vector<8x128xbf16>
    %cst_68 = arith.constant dense<0.000000e+00> : vector<8x128xf32>
    %215 = tpu.matmul %214, %169, %cst_68 {dimension_numbers = #tpu.dot_dimension_numbers<[1], [0], [0], [1], [0, 0, 1, 1], [], []>} : vector<8x128xbf16>, vector<128x128xbf16>, vector<8x128xf32> -> vector<8x128xf32>
    %216 = arith.addf %100, %215 : vector<8x128xf32>
    %217 = math.tanh %216 : vector<8x128xf32>
    %218 = arith.mulf %217, %8 : vector<8x128xf32>
    %219 = arith.addf %218, %11 : vector<8x128xf32>
    %c96_i32_69 = arith.constant 96 : i32
    %220 = tpu.dynamic_rotate %219 by %c96_i32_69 dim 1 : vector<8x128xf32>, i32 -> vector<8x128xf32>
    %c64_i32_70 = arith.constant 64 : i32
    %221 = tpu.dynamic_rotate %219 by %c64_i32_70 dim 1 : vector<8x128xf32>, i32 -> vector<8x128xf32>
    %c32_i32_71 = arith.constant 32 : i32
    %222 = tpu.dynamic_rotate %219 by %c32_i32_71 dim 1 : vector<8x128xf32>, i32 -> vector<8x128xf32>
    %223 = arith.mulf %220, %211 : vector<8x128xf32>
    %224 = arith.mulf %219, %221 : vector<8x128xf32>
    %225 = arith.addf %223, %224 : vector<8x128xf32>
    %226 = math.tanh %225 : vector<8x128xf32>
    %227 = arith.mulf %222, %226 : vector<8x128xf32>
    %228 = arith.truncf %227 : vector<8x128xf32> to vector<8x128xbf16>
    %cst_72 = arith.constant dense<0.000000e+00> : vector<8x128xf32>
    %229 = tpu.matmul %228, %169, %cst_72 {dimension_numbers = #tpu.dot_dimension_numbers<[1], [0], [0], [1], [0, 0, 1, 1], [], []>} : vector<8x128xbf16>, vector<128x128xbf16>, vector<8x128xf32> -> vector<8x128xf32>
    %230 = arith.addf %117, %229 : vector<8x128xf32>
    %231 = math.tanh %230 : vector<8x128xf32>
    %232 = arith.mulf %231, %8 : vector<8x128xf32>
    %233 = arith.addf %232, %11 : vector<8x128xf32>
    %c96_i32_73 = arith.constant 96 : i32
    %234 = tpu.dynamic_rotate %233 by %c96_i32_73 dim 1 : vector<8x128xf32>, i32 -> vector<8x128xf32>
    %c64_i32_74 = arith.constant 64 : i32
    %235 = tpu.dynamic_rotate %233 by %c64_i32_74 dim 1 : vector<8x128xf32>, i32 -> vector<8x128xf32>
    %c32_i32_75 = arith.constant 32 : i32
    %236 = tpu.dynamic_rotate %233 by %c32_i32_75 dim 1 : vector<8x128xf32>, i32 -> vector<8x128xf32>
    %237 = arith.mulf %234, %225 : vector<8x128xf32>
    %238 = arith.mulf %233, %235 : vector<8x128xf32>
    %239 = arith.addf %237, %238 : vector<8x128xf32>
    %240 = math.tanh %239 : vector<8x128xf32>
    %241 = arith.mulf %236, %240 : vector<8x128xf32>
    %242 = arith.truncf %241 : vector<8x128xf32> to vector<8x128xbf16>
    %cst_76 = arith.constant dense<0.000000e+00> : vector<8x128xf32>
    %243 = tpu.matmul %242, %169, %cst_76 {dimension_numbers = #tpu.dot_dimension_numbers<[1], [0], [0], [1], [0, 0, 1, 1], [], []>} : vector<8x128xbf16>, vector<128x128xbf16>, vector<8x128xf32> -> vector<8x128xf32>
    %244 = arith.addf %134, %243 : vector<8x128xf32>
    %245 = math.tanh %244 : vector<8x128xf32>
    %246 = arith.mulf %245, %8 : vector<8x128xf32>
    %247 = arith.addf %246, %11 : vector<8x128xf32>
    %c96_i32_77 = arith.constant 96 : i32
    %248 = tpu.dynamic_rotate %247 by %c96_i32_77 dim 1 : vector<8x128xf32>, i32 -> vector<8x128xf32>
    %c64_i32_78 = arith.constant 64 : i32
    %249 = tpu.dynamic_rotate %247 by %c64_i32_78 dim 1 : vector<8x128xf32>, i32 -> vector<8x128xf32>
    %c32_i32_79 = arith.constant 32 : i32
    %250 = tpu.dynamic_rotate %247 by %c32_i32_79 dim 1 : vector<8x128xf32>, i32 -> vector<8x128xf32>
    %251 = arith.mulf %248, %239 : vector<8x128xf32>
    %252 = arith.mulf %247, %249 : vector<8x128xf32>
    %253 = arith.addf %251, %252 : vector<8x128xf32>
    %254 = math.tanh %253 : vector<8x128xf32>
    %255 = arith.mulf %250, %254 : vector<8x128xf32>
    %256 = arith.truncf %255 : vector<8x128xf32> to vector<8x128xbf16>
    %cst_80 = arith.constant dense<0.000000e+00> : vector<8x128xf32>
    %257 = tpu.matmul %256, %169, %cst_80 {dimension_numbers = #tpu.dot_dimension_numbers<[1], [0], [0], [1], [0, 0, 1, 1], [], []>} : vector<8x128xbf16>, vector<128x128xbf16>, vector<8x128xf32> -> vector<8x128xf32>
    %258 = arith.addf %151, %257 : vector<8x128xf32>
    %259 = math.tanh %258 : vector<8x128xf32>
    %260 = arith.mulf %259, %8 : vector<8x128xf32>
    %261 = arith.addf %260, %11 : vector<8x128xf32>
    %c96_i32_81 = arith.constant 96 : i32
    %262 = tpu.dynamic_rotate %261 by %c96_i32_81 dim 1 : vector<8x128xf32>, i32 -> vector<8x128xf32>
    %c64_i32_82 = arith.constant 64 : i32
    %263 = tpu.dynamic_rotate %261 by %c64_i32_82 dim 1 : vector<8x128xf32>, i32 -> vector<8x128xf32>
    %c32_i32_83 = arith.constant 32 : i32
    %264 = tpu.dynamic_rotate %261 by %c32_i32_83 dim 1 : vector<8x128xf32>, i32 -> vector<8x128xf32>
    %265 = arith.mulf %262, %253 : vector<8x128xf32>
    %266 = arith.mulf %261, %263 : vector<8x128xf32>
    %267 = arith.addf %265, %266 : vector<8x128xf32>
    %268 = math.tanh %267 : vector<8x128xf32>
    %269 = arith.mulf %264, %268 : vector<8x128xf32>
    %270 = arith.truncf %269 : vector<8x128xf32> to vector<8x128xbf16>
    %cst_84 = arith.constant dense<0.000000e+00> : vector<8x128xf32>
    %271 = tpu.matmul %270, %169, %cst_84 {dimension_numbers = #tpu.dot_dimension_numbers<[1], [0], [0], [1], [0, 0, 1, 1], [], []>} : vector<8x128xbf16>, vector<128x128xbf16>, vector<8x128xf32> -> vector<8x128xf32>
    %272 = arith.addf %168, %271 : vector<8x128xf32>
    %273 = math.tanh %272 : vector<8x128xf32>
    %274 = arith.mulf %273, %8 : vector<8x128xf32>
    %275 = arith.addf %274, %11 : vector<8x128xf32>
    %c96_i32_85 = arith.constant 96 : i32
    %276 = tpu.dynamic_rotate %275 by %c96_i32_85 dim 1 : vector<8x128xf32>, i32 -> vector<8x128xf32>
    %c64_i32_86 = arith.constant 64 : i32
    %277 = tpu.dynamic_rotate %275 by %c64_i32_86 dim 1 : vector<8x128xf32>, i32 -> vector<8x128xf32>
    %c32_i32_87 = arith.constant 32 : i32
    %278 = tpu.dynamic_rotate %275 by %c32_i32_87 dim 1 : vector<8x128xf32>, i32 -> vector<8x128xf32>
    %279 = arith.mulf %276, %267 : vector<8x128xf32>
    %280 = arith.mulf %275, %277 : vector<8x128xf32>
    %281 = arith.addf %279, %280 : vector<8x128xf32>
    %282 = math.tanh %281 : vector<8x128xf32>
    %283 = arith.mulf %278, %282 : vector<8x128xf32>
    %c416 = arith.constant 416 : index
    %c0_88 = arith.constant 0 : index
    %284 = vector.load %arg2[%c416, %c0_88] : memref<800x128xbf16, #tpu.memory_space<vmem>>, vector<128x128xbf16>
    %c2 = arith.constant 2 : index
    %c0_89 = arith.constant 0 : index
    %285 = vector.load %arg3[%c2, %c0_89] : memref<8x128xf32, #tpu.memory_space<vmem>>, vector<1x128xf32>
    %286 = arith.truncf %283 : vector<8x128xf32> to vector<8x128xbf16>
    %cst_90 = arith.constant dense<0.000000e+00> : vector<8x128xf32>
    %287 = tpu.matmul %286, %284, %cst_90 {dimension_numbers = #tpu.dot_dimension_numbers<[1], [0], [0], [1], [0, 0, 1, 1], [], []>} : vector<8x128xbf16>, vector<128x128xbf16>, vector<8x128xf32> -> vector<8x128xf32>
    %288 = vector.broadcast %285 : vector<1x128xf32> to vector<8x128xf32>
    %289 = arith.addf %287, %288 : vector<8x128xf32>
    %cst_91 = arith.constant 0.000000e+00 : f32
    %290 = vector.broadcast %cst_91 : f32 to vector<8x128xf32>
    %291 = arith.cmpf ogt, %289, %290 : vector<8x128xf32>
    %cst_92 = arith.constant 0.00999999977 : f32
    %292 = vector.broadcast %cst_92 : f32 to vector<8x128xf32>
    %293 = arith.mulf %292, %289 : vector<8x128xf32>
    %294 = arith.select %291, %289, %293 : vector<8x128xi1>, vector<8x128xf32>
    %c544 = arith.constant 544 : index
    %c0_93 = arith.constant 0 : index
    %295 = vector.load %arg2[%c544, %c0_93] : memref<800x128xbf16, #tpu.memory_space<vmem>>, vector<128x128xbf16>
    %c3 = arith.constant 3 : index
    %c0_94 = arith.constant 0 : index
    %296 = vector.load %arg3[%c3, %c0_94] : memref<8x128xf32, #tpu.memory_space<vmem>>, vector<1x128xf32>
    %297 = arith.truncf %294 : vector<8x128xf32> to vector<8x128xbf16>
    %cst_95 = arith.constant dense<0.000000e+00> : vector<8x128xf32>
    %298 = tpu.matmul %297, %295, %cst_95 {dimension_numbers = #tpu.dot_dimension_numbers<[1], [0], [0], [1], [0, 0, 1, 1], [], []>} : vector<8x128xbf16>, vector<128x128xbf16>, vector<8x128xf32> -> vector<8x128xf32>
    %299 = vector.broadcast %296 : vector<1x128xf32> to vector<8x128xf32>
    %300 = arith.addf %298, %299 : vector<8x128xf32>
    %cst_96 = arith.constant 0.000000e+00 : f32
    %301 = vector.broadcast %cst_96 : f32 to vector<8x128xf32>
    %302 = arith.cmpf ogt, %300, %301 : vector<8x128xf32>
    %cst_97 = arith.constant 0.00999999977 : f32
    %303 = vector.broadcast %cst_97 : f32 to vector<8x128xf32>
    %304 = arith.mulf %303, %300 : vector<8x128xf32>
    %305 = arith.select %302, %300, %304 : vector<8x128xi1>, vector<8x128xf32>
    %c672 = arith.constant 672 : index
    %c0_98 = arith.constant 0 : index
    %306 = vector.load %arg2[%c672, %c0_98] : memref<800x128xbf16, #tpu.memory_space<vmem>>, vector<128x128xbf16>
    %c4 = arith.constant 4 : index
    %c0_99 = arith.constant 0 : index
    %307 = vector.load %arg3[%c4, %c0_99] : memref<8x128xf32, #tpu.memory_space<vmem>>, vector<1x128xf32>
    %308 = arith.truncf %305 : vector<8x128xf32> to vector<8x128xbf16>
    %cst_100 = arith.constant dense<0.000000e+00> : vector<8x128xf32>
    %309 = tpu.matmul %308, %306, %cst_100 {dimension_numbers = #tpu.dot_dimension_numbers<[1], [0], [0], [1], [0, 0, 1, 1], [], []>} : vector<8x128xbf16>, vector<128x128xbf16>, vector<8x128xf32> -> vector<8x128xf32>
    %310 = vector.broadcast %307 : vector<1x128xf32> to vector<8x128xf32>
    %311 = arith.addf %309, %310 : vector<8x128xf32>
    %c0_101 = arith.constant 0 : index
    %c0_102 = arith.constant 0 : index
    %312 = vector.load %arg4[%c0_101, %c0_102] : memref<8x128xf32, #tpu.memory_space<vmem>>, vector<8x128xf32>
    tpu.vector_store %arg4[%c0_101, %c0_102], %311 {strides = array<i32>} : memref<8x128xf32, #tpu.memory_space<vmem>>, vector<8x128xf32>,
    return
  }
  func.func @transform_0(%arg0: i32) -> (i32, i32) {
    %c0_i32 = arith.constant 0 : i32
    %c0_i32_0 = arith.constant 0 : i32
    return %arg0, %c0_i32 : i32, i32
  }
  func.func @transform_1(%arg0: i32) -> (i32, i32) {
    %c0_i32 = arith.constant 0 : i32
    %c0_i32_0 = arith.constant 0 : i32
    %c0_i32_1 = arith.constant 0 : i32
    return %c0_i32, %c0_i32_0 : i32, i32
  }
  func.func @transform_2(%arg0: i32) -> (i32, i32) {
    %c0_i32 = arith.constant 0 : i32
    %c0_i32_0 = arith.constant 0 : i32
    %c0_i32_1 = arith.constant 0 : i32
    return %c0_i32, %c0_i32_0 : i32, i32
  }
  func.func @transform_3(%arg0: i32) -> (i32, i32) {
    %c0_i32 = arith.constant 0 : i32
    %c0_i32_0 = arith.constant 0 : i32
    return %arg0, %c0_i32 : i32, i32
  }
}

</mosaic_0001>

<llo_original>
// kernel: coupled_lstm_forward.1
$region0: #{coupled_lstm_forward.1}
  #allocation0 [shape = 'u32[]', space=smem, size = 0x4, offset = 0x4, fixed_abs, tag = 'smem constant byte address 0x4 - core index']
  #allocation1 [shape = 'u32[144,128]{1,0:T(1,128)}', space=vmem, size = 0x12000, scoped, tag = 'internal scratch']
  %s0 = inlined_call_operand.vmem [shape: bf16[64,32], index: 0, kind: input, shape index: {}]
  %s1 = inlined_call_operand.hbm [shape: bf16[800,128], index: 1, kind: input, shape index: {}]
  %s2 = inlined_call_operand.vmem [shape: f32[8,128], index: 2, kind: input, shape index: {}]
  %s3 = inlined_call_operand.vmem [shape: f32[8,128], index: 3, kind: output, shape index: {}]
  %s4 = sld [smem:[#allocation0]]
  $region26: #{coupled_lstm_forward.1} parent=0
    _
  %s6 = ssub.s32 1, %s4
  %s7 = scalar_select 0, %s6, %s4
  $region1: #{coupled_lstm_forward.1} parent=0
    #allocation2 [shape = 'u8[204800]{0}', space=vmem, size = 0x32000, scoped, tag = 'input window, operand 1, single buffered']
    #allocation3 [shape = 's32[1]{0}', space=sflag, size = 0x4, scoped, tag = 'scoped memory for coupled_lstm_forward.1']
    %8 = vsyncpa [#allocation3], 0
    // Predicated region
    $region2: #{coupled_lstm_forward.1} parent=1 // pred_check
      _
    $region3: #{coupled_lstm_forward.1} parent=1 // pred_check_branch
      %10 = sbr.rel (0) target = $region5
    $region4: #{coupled_lstm_forward.1} parent=1 // pred_region
      _
    $region5: #{coupled_lstm_forward.1} parent=1 // pred_fallthru
      _
    // Predicated region
    $region6: #{coupled_lstm_forward.1} parent=1 // pred_check
      _
    $region7: #{coupled_lstm_forward.1} parent=1 // pred_check_branch
      %12 = sbr.rel (0) target = $region9
    $region8: #{coupled_lstm_forward.1} parent=1 // pred_region
      %s14 = ssub.s32 6400, 6400
      %15 = vsyncadd [#allocation3], %s14
      %s16 = sshll.u32 [#allocation2], 4
      %s17 = int_to_ptr.vmem [resolvable:$true] %s16
      %22 = dma.hbm_to_vmem [thread:$0]  %s1, 6400, %s17, [#allocation3], 64, 64, 4
    $region9: #{coupled_lstm_forward.1} parent=1 // pred_fallthru
      _
    // Predicated region
    $region10: #{coupled_lstm_forward.1} parent=1 // pred_check
      _
    $region11: #{coupled_lstm_forward.1} parent=1 // pred_check_branch
      %24 = sbr.rel (0) target = $region13
    $region12: #{coupled_lstm_forward.1} parent=1 // pred_region
      _
    $region13: #{coupled_lstm_forward.1} parent=1 // pred_fallthru
      _
    // Predicated region
    $region14: #{coupled_lstm_forward.1} parent=1 // pred_check
      _
    $region15: #{coupled_lstm_forward.1} parent=1 // pred_check_branch
      %26 = sbr.rel (0) target = $region17
    $region16: #{coupled_lstm_forward.1} parent=1 // pred_region
      %27 = dma.done [#allocation3], 6400
    $region17: #{coupled_lstm_forward.1} parent=1 // pred_fallthru
      _
    %v29 = vlaneseq
    %v30 = vand.u32 %v29, 127
    %vm31 = vcmp.ge.s32.totalorder %v30, 64
    %vm32 = vcmp.lt.s32.totalorder %v30, 96
    %vm33 = vmand %vm31, %vm32
    %v34 = vsel %vm33, 1.0, 0.5
    %v35 = vsel %vm33, 0.0, 0.5
    %v36 = vld [vmem:[#allocation2] sm:$0xf]
    %v37 = vld [vmem:[#allocation2 + $0x4] sm:$0xf]
    %v38 = vld [vmem:[#allocation2 + $0x8] sm:$0xf]
    %v39 = vld [vmem:[#allocation2 + $0xc] sm:$0xf]
    %v40 = vld [vmem:[%s0] sm:$0xf]
    %v41 = vld [vmem:[%s0 + $0x4] sm:$0xf]
    %v42 = vld [vmem:[%s0 + $0x8] sm:$0xf]
    %v43 = vld [vmem:[%s0 + $0xc] sm:$0xf]
    %v44 = vld [vmem:[%s0 + $0x10] sm:$0xf]
    %v45 = vld [vmem:[%s0 + $0x14] sm:$0xf]
    %v46 = vld [vmem:[%s0 + $0x18] sm:$0xf]
    %v47 = vld [vmem:[%s0 + $0x1c] sm:$0xf]
    %v48 = vld [vmem:[%s2] sm:$0x1]
    %v49 = vlaneseq
    %v50 = vshrl.u32 %v49, 7
    %v51 = vsub.s32 0, %v50
    %v52 = vrot.slane %v48, %v51
    %v61 = vunpack.c.l.b16 %v40
    %v62 = vunpack.c.l.b16 %v41
    %v63 = vunpack.c.l.b16 %v42
    %v64 = vunpack.c.l.b16 %v43
    %v65 = vunpack.c.l.b16 %v44
    %v66 = vunpack.c.l.b16 %v45
    %v67 = vunpack.c.l.b16 %v46
    %v68 = vunpack.c.l.b16 %v47
    %v69 = vpack.c.b16 %v62, %v61
    %v70 = vpack.c.b16 %v64, %v63
    %v71 = vpack.c.b16 %v66, %v65
    %v72 = vpack.c.b16 %v68, %v67
    %v77 = vunpack.c.l.b16 %v36
    %v78 = vunpack.c.l.b16 %v37
    %v79 = vunpack.c.l.b16 %v38
    %v80 = vunpack.c.l.b16 %v39
    %v81 = vpack.c.b16 %v78, %v77
    %v82 = vpack.c.b16 %v80, %v79
    %vm85 = vcmask 261120
    %v87 = vsel %vm85, %v69, 0
    %v90 = vsel %vm85, %v70, 0
    %v93 = vsel %vm85, %v71, 0
    %v96 = vsel %vm85, %v72, 0
    %98 = vmatprep.subr.bf16.mxu0 0
    %99 = vmatpush1.bf16.msra.mxu0 %v81
    %100 = vmatprep.subr.bf16.mxu0 0
    %101 = vmatpush1.bf16.msra.mxu0 %v82
    %102 = vmatprep.subr.bf16.mxu0 0
    %103 = vmatpush1.bf16.msra.mxu0 0
    %104 = vmatprep.subr.bf16.mxu0 0
    %105 = vmatpush1.bf16.msra.mxu0 0
    %106 = vmatprep.subr.bf16.mxu0 0
    %107 = vmatpush1.bf16.msra.mxu0 0
    %108 = vmatprep.subr.bf16.mxu0 0
    %109 = vmatpush1.bf16.msra.mxu0 0
    %110 = vmatprep.subr.bf16.mxu0 0
    %111 = vmatpush1.bf16.msra.mxu0 0
    %112 = vmatprep.subr.bf16.mxu0 0
    %113 = vmatpush1.bf16.msra.mxu0 0
    %114 = vmatprep.subr.bf16.mxu0 0
    %115 = vmatpush1.bf16.msra.mxu0 0
    %116 = vmatprep.subr.bf16.mxu0 0
    %117 = vmatpush1.bf16.msra.mxu0 0
    %118 = vmatprep.subr.bf16.mxu0 0
    %119 = vmatpush1.bf16.msra.mxu0 0
    %120 = vmatprep.subr.bf16.mxu0 0
    %121 = vmatpush1.bf16.msra.mxu0 0
    %122 = vmatprep.subr.bf16.mxu0 0
    %123 = vmatpush1.bf16.msra.mxu0 0
    %124 = vmatprep.subr.bf16.mxu0 0
    %125 = vmatpush1.bf16.msra.mxu0 0
    %126 = vmatprep.subr.bf16.mxu0 0
    %127 = vmatpush1.bf16.msra.mxu0 0
    %128 = vmatprep.subr.bf16.mxu0 0
    %129 = vmatpush1.bf16.msra.mxu0 0
    %130 = vmatprep.mubr.bf16.mxu0 0
    %131 = vmatmul.mubr.bf16.gmra.mrb[0].mxu0 %v87
    %v132 = vpop.f32.mrb[0].mxu0
    %v133 = vadd.f32 %v52, %v132
    %v134 = vpop.f32.mrb[0].mxu0
    %v135 = vpop.f32.mrb[0].mxu0
    %v136 = vadd.f32 %v52, %v135
    %v137 = vpop.f32.mrb[0].mxu0
    %138 = vmatprep.mubr.bf16.mxu0 0
    %139 = vmatmul.mubr.bf16.gmra.mrb[0].mxu0 %v90
    %v140 = vpop.f32.mrb[0].mxu0
    %v141 = vadd.f32 %v52, %v140
    %v142 = vpop.f32.mrb[0].mxu0
    %v143 = vpop.f32.mrb[0].mxu0
    %v144 = vadd.f32 %v52, %v143
    %v145 = vpop.f32.mrb[0].mxu0
    %146 = vmatprep.mubr.bf16.mxu0 0
    %147 = vmatmul.mubr.bf16.gmra.mrb[0].mxu0 %v93
    %v148 = vpop.f32.mrb[0].mxu0
    %v149 = vadd.f32 %v52, %v148
    %v150 = vpop.f32.mrb[0].mxu0
    %v151 = vpop.f32.mrb[0].mxu0
    %v152 = vadd.f32 %v52, %v151
    %v153 = vpop.f32.mrb[0].mxu0
    %154 = vmatprep.mubr.bf16.mxu0 0
    %155 = vmatmul.mubr.bf16.gmra.mrb[0].mxu0 %v96
    %v156 = vpop.f32.mrb[0].mxu0
    %v157 = vadd.f32 %v52, %v156
    %v158 = vpop.f32.mrb[0].mxu0
    %v159 = vpop.f32.mrb[0].mxu0
    %v160 = vadd.f32 %v52, %v159
    %v161 = vpop.f32.mrb[0].mxu0
    %162 = vdwg.mxu0
    %v163 = vld [vmem:[#allocation2 + $0x10] sm:$0xf]
    %v164 = vld [vmem:[#allocation2 + $0x14] sm:$0xf]
    %v165 = vld [vmem:[#allocation2 + $0x18] sm:$0xf]
    %v166 = vld [vmem:[#allocation2 + $0x1c] sm:$0xf]
    %v167 = vld [vmem:[#allocation2 + $0x20] sm:$0xf]
    %v168 = vld [vmem:[#allocation2 + $0x24] sm:$0xf]
    %v169 = vld [vmem:[#allocation2 + $0x28] sm:$0xf]
    %v170 = vld [vmem:[#allocation2 + $0x2c] sm:$0xf]
    %v171 = vld [vmem:[#allocation2 + $0x30] sm:$0xf]
    %v172 = vld [vmem:[#allocation2 + $0x34] sm:$0xf]
    %v173 = vld [vmem:[#allocation2 + $0x38] sm:$0xf]
    %v174 = vld [vmem:[#allocation2 + $0x3c] sm:$0xf]
    %v175 = vld [vmem:[#allocation2 + $0x40] sm:$0xf]
    %v176 = vld [vmem:[#allocation2 + $0x44] sm:$0xf]
    %v177 = vld [vmem:[#allocation2 + $0x48] sm:$0xf]
    %v178 = vld [vmem:[#allocation2 + $0x4c] sm:$0xf]
    %v179 = vld [vmem:[#allocation2 + $0x50] sm:$0xf]
    %v180 = vld [vmem:[#allocation2 + $0x54] sm:$0xf]
    %v181 = vld [vmem:[#allocation2 + $0x58] sm:$0xf]
    %v182 = vld [vmem:[#allocation2 + $0x5c] sm:$0xf]
    %v183 = vld [vmem:[#allocation2 + $0x60] sm:$0xf]
    %v184 = vld [vmem:[#allocation2 + $0x64] sm:$0xf]
    %v185 = vld [vmem:[#allocation2 + $0x68] sm:$0xf]
    %v186 = vld [vmem:[#allocation2 + $0x6c] sm:$0xf]
    %v187 = vld [vmem:[#allocation2 + $0x70] sm:$0xf]
    %v188 = vld [vmem:[#allocation2 + $0x74] sm:$0xf]
    %v189 = vld [vmem:[#allocation2 + $0x78] sm:$0xf]
    %v190 = vld [vmem:[#allocation2 + $0x7c] sm:$0xf]
    %v191 = vld [vmem:[#allocation2 + $0x80] sm:$0xf]
    %v192 = vld [vmem:[#allocation2 + $0x84] sm:$0xf]
    %v193 = vld [vmem:[#allocation2 + $0x88] sm:$0xf]
    %v194 = vld [vmem:[#allocation2 + $0x8c] sm:$0xf]
    %v195 = vld [vmem:[%s2 + $0x1] sm:$0x1]
    %v196 = vlaneseq
    %v197 = vshrl.u32 %v196, 7
    %v198 = vsub.s32 0, %v197
    %v199 = vrot.slane %v195, %v198
    %v216 = vunpack.c.l.b16 %v163
    %v217 = vunpack.c.l.b16 %v164
    %v218 = vunpack.c.l.b16 %v165
    %v219 = vunpack.c.l.b16 %v166
    %v220 = vunpack.c.l.b16 %v167
    %v221 = vunpack.c.l.b16 %v168
    %v222 = vunpack.c.l.b16 %v169
    %v223 = vunpack.c.l.b16 %v170
    %v224 = vunpack.c.l.b16 %v171
    %v225 = vunpack.c.l.b16 %v172
    %v226 = vunpack.c.l.b16 %v173
    %v227 = vunpack.c.l.b16 %v174
    %v228 = vunpack.c.l.b16 %v175
    %v229 = vunpack.c.l.b16 %v176
    %v230 = vunpack.c.l.b16 %v177
    %v231 = vunpack.c.l.b16 %v178
    %v232 = vpack.c.b16 %v217, %v216
    %v233 = vpack.c.b16 %v219, %v218
    %v234 = vpack.c.b16 %v221, %v220
    %v235 = vpack.c.b16 %v223, %v222
    %v236 = vpack.c.b16 %v225, %v224
    %v237 = vpack.c.b16 %v227, %v226
    %v238 = vpack.c.b16 %v229, %v228
    %v239 = vpack.c.b16 %v231, %v230
    %248 = vmatprep.subr.bf16.mxu0 0
    %249 = vmatpush1.bf16.msra.mxu0 %v232
    %250 = vmatprep.subr.bf16.mxu0 0
    %251 = vmatpush1.bf16.msra.mxu0 %v233
    %252 = vmatprep.subr.bf16.mxu0 0
    %253 = vmatpush1.bf16.msra.mxu0 %v234
    %254 = vmatprep.subr.bf16.mxu0 0
    %255 = vmatpush1.bf16.msra.mxu0 %v235
    %256 = vmatprep.subr.bf16.mxu0 0
    %257 = vmatpush1.bf16.msra.mxu0 %v236
    %258 = vmatprep.subr.bf16.mxu0 0
    %259 = vmatpush1.bf16.msra.mxu0 %v237
    %260 = vmatprep.subr.bf16.mxu0 0
    %261 = vmatpush1.bf16.msra.mxu0 %v238
    %262 = vmatprep.subr.bf16.mxu0 0
    %263 = vmatpush1.bf16.msra.mxu0 %v239
    %264 = vmatprep.subr.bf16.mxu0 0
    %265 = vmatpush1.bf16.msra.mxu0 0
    %266 = vmatprep.subr.bf16.mxu0 0
    %267 = vmatpush1.bf16.msra.mxu0 0
    %268 = vmatprep.subr.bf16.mxu0 0
    %269 = vmatpush1.bf16.msra.mxu0 0
    %270 = vmatprep.subr.bf16.mxu0 0
    %271 = vmatpush1.bf16.msra.mxu0 0
    %272 = vmatprep.subr.bf16.mxu0 0
    %273 = vmatpush1.bf16.msra.mxu0 0
    %274 = vmatprep.subr.bf16.mxu0 0
    %275 = vmatpush1.bf16.msra.mxu0 0
    %276 = vmatprep.subr.bf16.mxu0 0
    %277 = vmatpush1.bf16.msra.mxu0 0
    %278 = vmatprep.subr.bf16.mxu0 0
    %279 = vmatpush1.bf16.msra.mxu0 0
    %280 = vmatprep.mubr.bf16.mxu0 0
    %281 = vmatmul.mubr.bf16.gmra.mrb[0].mxu0 0
    %v282 = vpop.f32.mrb[0].mxu0
    %v283 = vadd.f32 0.0, %v282
    %v284 = vpop.f32.mrb[0].mxu0
    %v285 = vpop.f32.mrb[0].mxu0
    %v286 = vpop.f32.mrb[0].mxu0
    %287 = vdwg.mxu0
    %v288 = vadd.f32 %v133, %v283
    %v289 = vtanh.pop %v288
    %v290 = vmul.f32 %v289, %v34
    %v291 = vadd.f32 %v290, %v35
    %292 = vrot.lane.b32.xlu0 %v291, 96
    %v293 = vpop.permute.xlu0 %292
    %294 = vrot.lane.b32.xlu0 %v291, 64
    %v295 = vpop.permute.xlu0 %294
    %296 = vrot.lane.b32.xlu0 %v291, 32
    %v297 = vpop.permute.xlu0 %296
    %v298 = vmul.f32 %v293, 0.0
    %v299 = vmul.f32 %v291, %v295
    %v300 = vadd.f32 %v298, %v299
    %v301 = vtanh.pop %v300
    %v302 = vmul.f32 %v297, %v301
    %v303 = vpack.c.bf16 %v302, %v302
    %v320 = vunpack.c.l.b16 %v179
    %v321 = vunpack.c.l.b16 %v180
    %v322 = vunpack.c.l.b16 %v181
    %v323 = vunpack.c.l.b16 %v182
    %v324 = vunpack.c.l.b16 %v183
    %v325 = vunpack.c.l.b16 %v184
    %v326 = vunpack.c.l.b16 %v185
    %v327 = vunpack.c.l.b16 %v186
    %v328 = vunpack.c.l.b16 %v187
    %v329 = vunpack.c.l.b16 %v188
    %v330 = vunpack.c.l.b16 %v189
    %v331 = vunpack.c.l.b16 %v190
    %v332 = vunpack.c.l.b16 %v191
    %v333 = vunpack.c.l.b16 %v192
    %v334 = vunpack.c.l.b16 %v193
    %v335 = vunpack.c.l.b16 %v194
    %v336 = vpack.c.b16 %v321, %v320
    %v337 = vpack.c.b16 %v323, %v322
    %v338 = vpack.c.b16 %v325, %v324
    %v339 = vpack.c.b16 %v327, %v326
    %v340 = vpack.c.b16 %v329, %v328
    %v341 = vpack.c.b16 %v331, %v330
    %v342 = vpack.c.b16 %v333, %v332
    %v343 = vpack.c.b16 %v335, %v334
    %352 = vmatprep.subr.bf16.mxu0 0
    %353 = vmatpush1.bf16.msra.mxu0 %v336
    %354 = vmatprep.subr.bf16.mxu0 0
    %355 = vmatpush1.bf16.msra.mxu0 %v337
    %356 = vmatprep.subr.bf16.mxu0 0
    %357 = vmatpush1.bf16.msra.mxu0 %v338
    %358 = vmatprep.subr.bf16.mxu0 0
    %359 = vmatpush1.bf16.msra.mxu0 %v339
    %360 = vmatprep.subr.bf16.mxu0 0
    %361 = vmatpush1.bf16.msra.mxu0 %v340
    %362 = vmatprep.subr.bf16.mxu0 0
    %363 = vmatpush1.bf16.msra.mxu0 %v341
    %364 = vmatprep.subr.bf16.mxu0 0
    %365 = vmatpush1.bf16.msra.mxu0 %v342
    %366 = vmatprep.subr.bf16.mxu0 0
    %367 = vmatpush1.bf16.msra.mxu0 %v343
    %368 = vmatprep.subr.bf16.mxu0 0
    %369 = vmatpush1.bf16.msra.mxu0 0
    %370 = vmatprep.subr.bf16.mxu0 0
    %371 = vmatpush1.bf16.msra.mxu0 0
    %372 = vmatprep.subr.bf16.mxu0 0
    %373 = vmatpush1.bf16.msra.mxu0 0
    %374 = vmatprep.subr.bf16.mxu0 0
    %375 = vmatpush1.bf16.msra.mxu0 0
    %376 = vmatprep.subr.bf16.mxu0 0
    %377 = vmatpush1.bf16.msra.mxu0 0
    %378 = vmatprep.subr.bf16.mxu0 0
    %379 = vmatpush1.bf16.msra.mxu0 0
    %380 = vmatprep.subr.bf16.mxu0 0
    %381 = vmatpush1.bf16.msra.mxu0 0
    %382 = vmatprep.subr.bf16.mxu0 0
    %383 = vmatpush1.bf16.msra.mxu0 0
    %384 = vmatprep.mubr.bf16.mxu0 0
    %385 = vmatmul.mubr.bf16.gmra.mrb[0].mxu0 %v303
    %v386 = vpop.f32.mrb[0].mxu0
    %v387 = vadd.f32 %v199, %v386
    %v388 = vpop.f32.mrb[0].mxu0
    %v389 = vpop.f32.mrb[0].mxu0
    %v390 = vpop.f32.mrb[0].mxu0
    %391 = vdwg.mxu0
    %392 = vmatprep.subr.bf16.mxu0 0
    %393 = vmatpush1.bf16.msra.mxu0 %v232
    %394 = vmatprep.subr.bf16.mxu0 0
    %395 = vmatpush1.bf16.msra.mxu0 %v233
    %396 = vmatprep.subr.bf16.mxu0 0
    %397 = vmatpush1.bf16.msra.mxu0 %v234
    %398 = vmatprep.subr.bf16.mxu0 0
    %399 = vmatpush1.bf16.msra.mxu0 %v235
    %400 = vmatprep.subr.bf16.mxu0 0
    %401 = vmatpush1.bf16.msra.mxu0 %v236
    %402 = vmatprep.subr.bf16.mxu0 0
    %403 = vmatpush1.bf16.msra.mxu0 %v237
    %404 = vmatprep.subr.bf16.mxu0 0
    %405 = vmatpush1.bf16.msra.mxu0 %v238
    %406 = vmatprep.subr.bf16.mxu0 0
    %407 = vmatpush1.bf16.msra.mxu0 %v239
    %408 = vmatprep.subr.bf16.mxu0 0
    %409 = vmatpush1.bf16.msra.mxu0 0
    %410 = vmatprep.subr.bf16.mxu0 0
    %411 = vmatpush1.bf16.msra.mxu0 0
    %412 = vmatprep.subr.bf16.mxu0 0
    %413 = vmatpush1.bf16.msra.mxu0 0
    %414 = vmatprep.subr.bf16.mxu0 0
    %415 = vmatpush1.bf16.msra.mxu0 0
    %416 = vmatprep.subr.bf16.mxu0 0
    %417 = vmatpush1.bf16.msra.mxu0 0
    %418 = vmatprep.subr.bf16.mxu0 0
    %419 = vmatpush1.bf16.msra.mxu0 0
    %420 = vmatprep.subr.bf16.mxu0 0
    %421 = vmatpush1.bf16.msra.mxu0 0
    %422 = vmatprep.subr.bf16.mxu0 0
    %423 = vmatpush1.bf16.msra.mxu0 0
    %424 = vmatprep.mubr.bf16.mxu0 0
    %425 = vmatmul.mubr.bf16.gmra.mrb[0].mxu0 %v303
    %v426 = vpop.f32.mrb[0].mxu0
    %v427 = vadd.f32 0.0, %v426
    %v428 = vpop.f32.mrb[0].mxu0
    %v429 = vpop.f32.mrb[0].mxu0
    %v430 = vpop.f32.mrb[0].mxu0
    %431 = vdwg.mxu0
    %v432 = vadd.f32 %v136, %v427
    %v433 = vtanh.pop %v432
    %v434 = vmul.f32 %v433, %v34
    %v435 = vadd.f32 %v434, %v35
    %436 = vrot.lane.b32.xlu0 %v435, 96
    %v437 = vpop.permute.xlu0 %436
    %438 = vrot.lane.b32.xlu0 %v435, 64
    %v439 = vpop.permute.xlu0 %438
    %440 = vrot.lane.b32.xlu0 %v435, 32
    %v441 = vpop.permute.xlu0 %440
    %v442 = vmul.f32 %v437, %v300
    %v443 = vmul.f32 %v435, %v439
    %v444 = vadd.f32 %v442, %v443
    %v445 = vtanh.pop %v444
    %v446 = vmul.f32 %v441, %v445
    %v447 = vpack.c.bf16 %v446, %v446
    %448 = vmatprep.subr.bf16.mxu0 0
    %449 = vmatpush1.bf16.msra.mxu0 %v336
    %450 = vmatprep.subr.bf16.mxu0 0
    %451 = vmatpush1.bf16.msra.mxu0 %v337
    %452 = vmatprep.subr.bf16.mxu0 0
    %453 = vmatpush1.bf16.msra.mxu0 %v338
    %454 = vmatprep.subr.bf16.mxu0 0
    %455 = vmatpush1.bf16.msra.mxu0 %v339
    %456 = vmatprep.subr.bf16.mxu0 0
    %457 = vmatpush1.bf16.msra.mxu0 %v340
    %458 = vmatprep.subr.bf16.mxu0 0
    %459 = vmatpush1.bf16.msra.mxu0 %v341
    %460 = vmatprep.subr.bf16.mxu0 0
    %461 = vmatpush1.bf16.msra.mxu0 %v342
    %462 = vmatprep.subr.bf16.mxu0 0
    %463 = vmatpush1.bf16.msra.mxu0 %v343
    %464 = vmatprep.subr.bf16.mxu0 0
    %465 = vmatpush1.bf16.msra.mxu0 0
    %466 = vmatprep.subr.bf16.mxu0 0
    %467 = vmatpush1.bf16.msra.mxu0 0
    %468 = vmatprep.subr.bf16.mxu0 0
    %469 = vmatpush1.bf16.msra.mxu0 0
    %470 = vmatprep.subr.bf16.mxu0 0
    %471 = vmatpush1.bf16.msra.mxu0 0
    %472 = vmatprep.subr.bf16.mxu0 0
    %473 = vmatpush1.bf16.msra.mxu0 0
    %474 = vmatprep.subr.bf16.mxu0 0
    %475 = vmatpush1.bf16.msra.mxu0 0
    %476 = vmatprep.subr.bf16.mxu0 0
    %477 = vmatpush1.bf16.msra.mxu0 0
    %478 = vmatprep.subr.bf16.mxu0 0
    %479 = vmatpush1.bf16.msra.mxu0 0
    %480 = vmatprep.mubr.bf16.mxu0 0
    %481 = vmatmul.mubr.bf16.gmra.mrb[0].mxu0 %v447
    %v482 = vpop.f32.mrb[0].mxu0
    %v483 = vadd.f32 %v199, %v482
    %v484 = vpop.f32.mrb[0].mxu0
    %v485 = vpop.f32.mrb[0].mxu0
    %v486 = vpop.f32.mrb[0].mxu0
    %487 = vdwg.mxu0
    %488 = vmatprep.subr.bf16.mxu0 0
    %489 = vmatpush1.bf16.msra.mxu0 %v232
    %490 = vmatprep.subr.bf16.mxu0 0
    %491 = vmatpush1.bf16.msra.mxu0 %v233
    %492 = vmatprep.subr.bf16.mxu0 0
    %493 = vmatpush1.bf16.msra.mxu0 %v234
    %494 = vmatprep.subr.bf16.mxu0 0
    %495 = vmatpush1.bf16.msra.mxu0 %v235
    %496 = vmatprep.subr.bf16.mxu0 0
    %497 = vmatpush1.bf16.msra.mxu0 %v236
    %498 = vmatprep.subr.bf16.mxu0 0
    %499 = vmatpush1.bf16.msra.mxu0 %v237
    %500 = vmatprep.subr.bf16.mxu0 0
    %501 = vmatpush1.bf16.msra.mxu0 %v238
    %502 = vmatprep.subr.bf16.mxu0 0
    %503 = vmatpush1.bf16.msra.mxu0 %v239
    %504 = vmatprep.subr.bf16.mxu0 0
    %505 = vmatpush1.bf16.msra.mxu0 0
    %506 = vmatprep.subr.bf16.mxu0 0
    %507 = vmatpush1.bf16.msra.mxu0 0
    %508 = vmatprep.subr.bf16.mxu0 0
    %509 = vmatpush1.bf16.msra.mxu0 0
    %510 = vmatprep.subr.bf16.mxu0 0
    %511 = vmatpush1.bf16.msra.mxu0 0
    %512 = vmatprep.subr.bf16.mxu0 0
    %513 = vmatpush1.bf16.msra.mxu0 0
    %514 = vmatprep.subr.bf16.mxu0 0
    %515 = vmatpush1.bf16.msra.mxu0 0
    %516 = vmatprep.subr.bf16.mxu0 0
    %517 = vmatpush1.bf16.msra.mxu0 0
    %518 = vmatprep.subr.bf16.mxu0 0
    %519 = vmatpush1.bf16.msra.mxu0 0
    %520 = vmatprep.mubr.bf16.mxu0 0
    %521 = vmatmul.mubr.bf16.gmra.mrb[0].mxu0 %v447
    %v522 = vpop.f32.mrb[0].mxu0
    %v523 = vadd.f32 0.0, %v522
    %v524 = vpop.f32.mrb[0].mxu0
    %v525 = vpop.f32.mrb[0].mxu0
    %v526 = vpop.f32.mrb[0].mxu0
    %527 = vdwg.mxu0
    %v528 = vadd.f32 %v141, %v523
    %v529 = vtanh.pop %v528
    %v530 = vmul.f32 %v529, %v34
    %v531 = vadd.f32 %v530, %v35
    %532 = vrot.lane.b32.xlu0 %v531, 96
    %v533 = vpop.permute.xlu0 %532
    %534 = vrot.lane.b32.xlu0 %v531, 64
    %v535 = vpop.permute.xlu0 %534
    %536 = vrot.lane.b32.xlu0 %v531, 32
    %v537 = vpop.permute.xlu0 %536
    %v538 = vmul.f32 %v533, %v444
    %v539 = vmul.f32 %v531, %v535
    %v540 = vadd.f32 %v538, %v539
    %v541 = vtanh.pop %v540
    %v542 = vmul.f32 %v537, %v541
    %v543 = vpack.c.bf16 %v542, %v542
    %544 = vmatprep.subr.bf16.mxu0 0
    %545 = vmatpush1.bf16.msra.mxu0 %v336
    %546 = vmatprep.subr.bf16.mxu0 0
    %547 = vmatpush1.bf16.msra.mxu0 %v337
    %548 = vmatprep.subr.bf16.mxu0 0
    %549 = vmatpush1.bf16.msra.mxu0 %v338
    %550 = vmatprep.subr.bf16.mxu0 0
    %551 = vmatpush1.bf16.msra.mxu0 %v339
    %552 = vmatprep.subr.bf16.mxu0 0
    %553 = vmatpush1.bf16.msra.mxu0 %v340
    %554 = vmatprep.subr.bf16.mxu0 0
    %555 = vmatpush1.bf16.msra.mxu0 %v341
    %556 = vmatprep.subr.bf16.mxu0 0
    %557 = vmatpush1.bf16.msra.mxu0 %v342
    %558 = vmatprep.subr.bf16.mxu0 0
    %559 = vmatpush1.bf16.msra.mxu0 %v343
    %560 = vmatprep.subr.bf16.mxu0 0
    %561 = vmatpush1.bf16.msra.mxu0 0
    %562 = vmatprep.subr.bf16.mxu0 0
    %563 = vmatpush1.bf16.msra.mxu0 0
    %564 = vmatprep.subr.bf16.mxu0 0
    %565 = vmatpush1.bf16.msra.mxu0 0
    %566 = vmatprep.subr.bf16.mxu0 0
    %567 = vmatpush1.bf16.msra.mxu0 0
    %568 = vmatprep.subr.bf16.mxu0 0
    %569 = vmatpush1.bf16.msra.mxu0 0
    %570 = vmatprep.subr.bf16.mxu0 0
    %571 = vmatpush1.bf16.msra.mxu0 0
    %572 = vmatprep.subr.bf16.mxu0 0
    %573 = vmatpush1.bf16.msra.mxu0 0
    %574 = vmatprep.subr.bf16.mxu0 0
    %575 = vmatpush1.bf16.msra.mxu0 0
    %576 = vmatprep.mubr.bf16.mxu0 0
    %577 = vmatmul.mubr.bf16.gmra.mrb[0].mxu0 %v543
    %v578 = vpop.f32.mrb[0].mxu0
    %v579 = vadd.f32 %v199, %v578
    %v580 = vpop.f32.mrb[0].mxu0
    %v581 = vpop.f32.mrb[0].mxu0
    %v582 = vpop.f32.mrb[0].mxu0
    %583 = vdwg.mxu0
    %584 = vmatprep.subr.bf16.mxu0 0
    %585 = vmatpush1.bf16.msra.mxu0 %v232
    %586 = vmatprep.subr.bf16.mxu0 0
    %587 = vmatpush1.bf16.msra.mxu0 %v233
    %588 = vmatprep.subr.bf16.mxu0 0
    %589 = vmatpush1.bf16.msra.mxu0 %v234
    %590 = vmatprep.subr.bf16.mxu0 0
    %591 = vmatpush1.bf16.msra.mxu0 %v235
    %592 = vmatprep.subr.bf16.mxu0 0
    %593 = vmatpush1.bf16.msra.mxu0 %v236
    %594 = vmatprep.subr.bf16.mxu0 0
    %595 = vmatpush1.bf16.msra.mxu0 %v237
    %596 = vmatprep.subr.bf16.mxu0 0
    %597 = vmatpush1.bf16.msra.mxu0 %v238
    %598 = vmatprep.subr.bf16.mxu0 0
    %599 = vmatpush1.bf16.msra.mxu0 %v239
    %600 = vmatprep.subr.bf16.mxu0 0
    %601 = vmatpush1.bf16.msra.mxu0 0
    %602 = vmatprep.subr.bf16.mxu0 0
    %603 = vmatpush1.bf16.msra.mxu0 0
    %604 = vmatprep.subr.bf16.mxu0 0
    %605 = vmatpush1.bf16.msra.mxu0 0
    %606 = vmatprep.subr.bf16.mxu0 0
    %607 = vmatpush1.bf16.msra.mxu0 0
    %608 = vmatprep.subr.bf16.mxu0 0
    %609 = vmatpush1.bf16.msra.mxu0 0
    %610 = vmatprep.subr.bf16.mxu0 0
    %611 = vmatpush1.bf16.msra.mxu0 0
    %612 = vmatprep.subr.bf16.mxu0 0
    %613 = vmatpush1.bf16.msra.mxu0 0
    %614 = vmatprep.subr.bf16.mxu0 0
    %615 = vmatpush1.bf16.msra.mxu0 0
    %616 = vmatprep.mubr.bf16.mxu0 0
    %617 = vmatmul.mubr.bf16.gmra.mrb[0].mxu0 %v543
    %v618 = vpop.f32.mrb[0].mxu0
    %v619 = vadd.f32 0.0, %v618
    %v620 = vpop.f32.mrb[0].mxu0
    %v621 = vpop.f32.mrb[0].mxu0
    %v622 = vpop.f32.mrb[0].mxu0
    %623 = vdwg.mxu0
    %v624 = vadd.f32 %v144, %v619
    %v625 = vtanh.pop %v624
    %v626 = vmul.f32 %v625, %v34
    %v627 = vadd.f32 %v626, %v35
    %628 = vrot.lane.b32.xlu0 %v627, 96
    %v629 = vpop.permute.xlu0 %628
    %630 = vrot.lane.b32.xlu0 %v627, 64
    %v631 = vpop.permute.xlu0 %630
    %632 = vrot.lane.b32.xlu0 %v627, 32
    %v633 = vpop.permute.xlu0 %632
    %v634 = vmul.f32 %v629, %v540
    %v635 = vmul.f32 %v627, %v631
    %v636 = vadd.f32 %v634, %v635
    %v637 = vtanh.pop %v636
    %v638 = vmul.f32 %v633, %v637
    %v639 = vpack.c.bf16 %v638, %v638
    %640 = vmatprep.subr.bf16.mxu0 0
    %641 = vmatpush1.bf16.msra.mxu0 %v336
    %642 = vmatprep.subr.bf16.mxu0 0
    %643 = vmatpush1.bf16.msra.mxu0 %v337
    %644 = vmatprep.subr.bf16.mxu0 0
    %645 = vmatpush1.bf16.msra.mxu0 %v338
    %646 = vmatprep.subr.bf16.mxu0 0
    %647 = vmatpush1.bf16.msra.mxu0 %v339
    %648 = vmatprep.subr.bf16.mxu0 0
    %649 = vmatpush1.bf16.msra.mxu0 %v340
    %650 = vmatprep.subr.bf16.mxu0 0
    %651 = vmatpush1.bf16.msra.mxu0 %v341
    %652 = vmatprep.subr.bf16.mxu0 0
    %653 = vmatpush1.bf16.msra.mxu0 %v342
    %654 = vmatprep.subr.bf16.mxu0 0
    %655 = vmatpush1.bf16.msra.mxu0 %v343
    %656 = vmatprep.subr.bf16.mxu0 0
    %657 = vmatpush1.bf16.msra.mxu0 0
    %658 = vmatprep.subr.bf16.mxu0 0
    %659 = vmatpush1.bf16.msra.mxu0 0
    %660 = vmatprep.subr.bf16.mxu0 0
    %661 = vmatpush1.bf16.msra.mxu0 0
    %662 = vmatprep.subr.bf16.mxu0 0
    %663 = vmatpush1.bf16.msra.mxu0 0
    %664 = vmatprep.subr.bf16.mxu0 0
    %665 = vmatpush1.bf16.msra.mxu0 0
    %666 = vmatprep.subr.bf16.mxu0 0
    %667 = vmatpush1.bf16.msra.mxu0 0
    %668 = vmatprep.subr.bf16.mxu0 0
    %669 = vmatpush1.bf16.msra.mxu0 0
    %670 = vmatprep.subr.bf16.mxu0 0
    %671 = vmatpush1.bf16.msra.mxu0 0
    %672 = vmatprep.mubr.bf16.mxu0 0
    %673 = vmatmul.mubr.bf16.gmra.mrb[0].mxu0 %v639
    %v674 = vpop.f32.mrb[0].mxu0
    %v675 = vadd.f32 %v199, %v674
    %v676 = vpop.f32.mrb[0].mxu0
    %v677 = vpop.f32.mrb[0].mxu0
    %v678 = vpop.f32.mrb[0].mxu0
    %679 = vdwg.mxu0
    %680 = vmatprep.subr.bf16.mxu0 0
    %681 = vmatpush1.bf16.msra.mxu0 %v232
    %682 = vmatprep.subr.bf16.mxu0 0
    %683 = vmatpush1.bf16.msra.mxu0 %v233
    %684 = vmatprep.subr.bf16.mxu0 0
    %685 = vmatpush1.bf16.msra.mxu0 %v234
    %686 = vmatprep.subr.bf16.mxu0 0
    %687 = vmatpush1.bf16.msra.mxu0 %v235
    %688 = vmatprep.subr.bf16.mxu0 0
    %689 = vmatpush1.bf16.msra.mxu0 %v236
    %690 = vmatprep.subr.bf16.mxu0 0
    %691 = vmatpush1.bf16.msra.mxu0 %v237
    %692 = vmatprep.subr.bf16.mxu0 0
    %693 = vmatpush1.bf16.msra.mxu0 %v238
    %694 = vmatprep.subr.bf16.mxu0 0
    %695 = vmatpush1.bf16.msra.mxu0 %v239
    %696 = vmatprep.subr.bf16.mxu0 0
    %697 = vmatpush1.bf16.msra.mxu0 0
    %698 = vmatprep.subr.bf16.mxu0 0
    %699 = vmatpush1.bf16.msra.mxu0 0
    %700 = vmatprep.subr.bf16.mxu0 0
    %701 = vmatpush1.bf16.msra.mxu0 0
    %702 = vmatprep.subr.bf16.mxu0 0
    %703 = vmatpush1.bf16.msra.mxu0 0
    %704 = vmatprep.subr.bf16.mxu0 0
    %705 = vmatpush1.bf16.msra.mxu0 0
    %706 = vmatprep.subr.bf16.mxu0 0
    %707 = vmatpush1.bf16.msra.mxu0 0
    %708 = vmatprep.subr.bf16.mxu0 0
    %709 = vmatpush1.bf16.msra.mxu0 0
    %710 = vmatprep.subr.bf16.mxu0 0
    %711 = vmatpush1.bf16.msra.mxu0 0
    %712 = vmatprep.mubr.bf16.mxu0 0
    %713 = vmatmul.mubr.bf16.gmra.mrb[0].mxu0 %v639
    %v714 = vpop.f32.mrb[0].mxu0
    %v715 = vadd.f32 0.0, %v714
    %v716 = vpop.f32.mrb[0].mxu0
    %v717 = vpop.f32.mrb[0].mxu0
    %v718 = vpop.f32.mrb[0].mxu0
    %719 = vdwg.mxu0
    %v720 = vadd.f32 %v149, %v715
    %v721 = vtanh.pop %v720
    %v722 = vmul.f32 %v721, %v34
    %v723 = vadd.f32 %v722, %v35
    %724 = vrot.lane.b32.xlu0 %v723, 96
    %v725 = vpop.permute.xlu0 %724
    %726 = vrot.lane.b32.xlu0 %v723, 64
    %v727 = vpop.permute.xlu0 %726
    %728 = vrot.lane.b32.xlu0 %v723, 32
    %v729 = vpop.permute.xlu0 %728
    %v730 = vmul.f32 %v725, %v636
    %v731 = vmul.f32 %v723, %v727
    %v732 = vadd.f32 %v730, %v731
    %v733 = vtanh.pop %v732
    %v734 = vmul.f32 %v729, %v733
    %v735 = vpack.c.bf16 %v734, %v734
    %736 = vmatprep.subr.bf16.mxu0 0
    %737 = vmatpush1.bf16.msra.mxu0 %v336
    %738 = vmatprep.subr.bf16.mxu0 0
    %739 = vmatpush1.bf16.msra.mxu0 %v337
    %740 = vmatprep.subr.bf16.mxu0 0
    %741 = vmatpush1.bf16.msra.mxu0 %v338
    %742 = vmatprep.subr.bf16.mxu0 0
    %743 = vmatpush1.bf16.msra.mxu0 %v339
    %744 = vmatprep.subr.bf16.mxu0 0
    %745 = vmatpush1.bf16.msra.mxu0 %v340
    %746 = vmatprep.subr.bf16.mxu0 0
    %747 = vmatpush1.bf16.msra.mxu0 %v341
    %748 = vmatprep.subr.bf16.mxu0 0
    %749 = vmatpush1.bf16.msra.mxu0 %v342
    %750 = vmatprep.subr.bf16.mxu0 0
    %751 = vmatpush1.bf16.msra.mxu0 %v343
    %752 = vmatprep.subr.bf16.mxu0 0
    %753 = vmatpush1.bf16.msra.mxu0 0
    %754 = vmatprep.subr.bf16.mxu0 0
    %755 = vmatpush1.bf16.msra.mxu0 0
    %756 = vmatprep.subr.bf16.mxu0 0
    %757 = vmatpush1.bf16.msra.mxu0 0
    %758 = vmatprep.subr.bf16.mxu0 0
    %759 = vmatpush1.bf16.msra.mxu0 0
    %760 = vmatprep.subr.bf16.mxu0 0
    %761 = vmatpush1.bf16.msra.mxu0 0
    %762 = vmatprep.subr.bf16.mxu0 0
    %763 = vmatpush1.bf16.msra.mxu0 0
    %764 = vmatprep.subr.bf16.mxu0 0
    %765 = vmatpush1.bf16.msra.mxu0 0
    %766 = vmatprep.subr.bf16.mxu0 0
    %767 = vmatpush1.bf16.msra.mxu0 0
    %768 = vmatprep.mubr.bf16.mxu0 0
    %769 = vmatmul.mubr.bf16.gmra.mrb[0].mxu0 %v735
    %v770 = vpop.f32.mrb[0].mxu0
    %v771 = vadd.f32 %v199, %v770
    %v772 = vpop.f32.mrb[0].mxu0
    %v773 = vpop.f32.mrb[0].mxu0
    %v774 = vpop.f32.mrb[0].mxu0
    %775 = vdwg.mxu0
    %776 = vmatprep.subr.bf16.mxu0 0
    %777 = vmatpush1.bf16.msra.mxu0 %v232
    %778 = vmatprep.subr.bf16.mxu0 0
    %779 = vmatpush1.bf16.msra.mxu0 %v233
    %780 = vmatprep.subr.bf16.mxu0 0
    %781 = vmatpush1.bf16.msra.mxu0 %v234
    %782 = vmatprep.subr.bf16.mxu0 0
    %783 = vmatpush1.bf16.msra.mxu0 %v235
    %784 = vmatprep.subr.bf16.mxu0 0
    %785 = vmatpush1.bf16.msra.mxu0 %v236
    %786 = vmatprep.subr.bf16.mxu0 0
    %787 = vmatpush1.bf16.msra.mxu0 %v237
    %788 = vmatprep.subr.bf16.mxu0 0
    %789 = vmatpush1.bf16.msra.mxu0 %v238
    %790 = vmatprep.subr.bf16.mxu0 0
    %791 = vmatpush1.bf16.msra.mxu0 %v239
    %792 = vmatprep.subr.bf16.mxu0 0
    %793 = vmatpush1.bf16.msra.mxu0 0
    %794 = vmatprep.subr.bf16.mxu0 0
    %795 = vmatpush1.bf16.msra.mxu0 0
    %796 = vmatprep.subr.bf16.mxu0 0
    %797 = vmatpush1.bf16.msra.mxu0 0
    %798 = vmatprep.subr.bf16.mxu0 0
    %799 = vmatpush1.bf16.msra.mxu0 0
    %800 = vmatprep.subr.bf16.mxu0 0
    %801 = vmatpush1.bf16.msra.mxu0 0
    %802 = vmatprep.subr.bf16.mxu0 0
    %803 = vmatpush1.bf16.msra.mxu0 0
    %804 = vmatprep.subr.bf16.mxu0 0
    %805 = vmatpush1.bf16.msra.mxu0 0
    %806 = vmatprep.subr.bf16.mxu0 0
    %807 = vmatpush1.bf16.msra.mxu0 0
    %808 = vmatprep.mubr.bf16.mxu0 0
    %809 = vmatmul.mubr.bf16.gmra.mrb[0].mxu0 %v735
    %v810 = vpop.f32.mrb[0].mxu0
    %v811 = vadd.f32 0.0, %v810
    %v812 = vpop.f32.mrb[0].mxu0
    %v813 = vpop.f32.mrb[0].mxu0
    %v814 = vpop.f32.mrb[0].mxu0
    %815 = vdwg.mxu0
    %v816 = vadd.f32 %v152, %v811
    %v817 = vtanh.pop %v816
    %v818 = vmul.f32 %v817, %v34
    %v819 = vadd.f32 %v818, %v35
    %820 = vrot.lane.b32.xlu0 %v819, 96
    %v821 = vpop.permute.xlu0 %820
    %822 = vrot.lane.b32.xlu0 %v819, 64
    %v823 = vpop.permute.xlu0 %822
    %824 = vrot.lane.b32.xlu0 %v819, 32
    %v825 = vpop.permute.xlu0 %824
    %v826 = vmul.f32 %v821, %v732
    %v827 = vmul.f32 %v819, %v823
    %v828 = vadd.f32 %v826, %v827
    %v829 = vtanh.pop %v828
    %v830 = vmul.f32 %v825, %v829
    %v831 = vpack.c.bf16 %v830, %v830
    %832 = vmatprep.subr.bf16.mxu0 0
    %833 = vmatpush1.bf16.msra.mxu0 %v336
    %834 = vmatprep.subr.bf16.mxu0 0
    %835 = vmatpush1.bf16.msra.mxu0 %v337
    %836 = vmatprep.subr.bf16.mxu0 0
    %837 = vmatpush1.bf16.msra.mxu0 %v338
    %838 = vmatprep.subr.bf16.mxu0 0
    %839 = vmatpush1.bf16.msra.mxu0 %v339
    %840 = vmatprep.subr.bf16.mxu0 0
    %841 = vmatpush1.bf16.msra.mxu0 %v340
    %842 = vmatprep.subr.bf16.mxu0 0
    %843 = vmatpush1.bf16.msra.mxu0 %v341
    %844 = vmatprep.subr.bf16.mxu0 0
    %845 = vmatpush1.bf16.msra.mxu0 %v342
    %846 = vmatprep.subr.bf16.mxu0 0
    %847 = vmatpush1.bf16.msra.mxu0 %v343
    %848 = vmatprep.subr.bf16.mxu0 0
    %849 = vmatpush1.bf16.msra.mxu0 0
    %850 = vmatprep.subr.bf16.mxu0 0
    %851 = vmatpush1.bf16.msra.mxu0 0
    %852 = vmatprep.subr.bf16.mxu0 0
    %853 = vmatpush1.bf16.msra.mxu0 0
    %854 = vmatprep.subr.bf16.mxu0 0
    %855 = vmatpush1.bf16.msra.mxu0 0
    %856 = vmatprep.subr.bf16.mxu0 0
    %857 = vmatpush1.bf16.msra.mxu0 0
    %858 = vmatprep.subr.bf16.mxu0 0
    %859 = vmatpush1.bf16.msra.mxu0 0
    %860 = vmatprep.subr.bf16.mxu0 0
    %861 = vmatpush1.bf16.msra.mxu0 0
    %862 = vmatprep.subr.bf16.mxu0 0
    %863 = vmatpush1.bf16.msra.mxu0 0
    %864 = vmatprep.mubr.bf16.mxu0 0
    %865 = vmatmul.mubr.bf16.gmra.mrb[0].mxu0 %v831
    %v866 = vpop.f32.mrb[0].mxu0
    %v867 = vadd.f32 %v199, %v866
    %v868 = vpop.f32.mrb[0].mxu0
    %v869 = vpop.f32.mrb[0].mxu0
    %v870 = vpop.f32.mrb[0].mxu0
    %871 = vdwg.mxu0
    %872 = vmatprep.subr.bf16.mxu0 0
    %873 = vmatpush1.bf16.msra.mxu0 %v232
    %874 = vmatprep.subr.bf16.mxu0 0
    %875 = vmatpush1.bf16.msra.mxu0 %v233
    %876 = vmatprep.subr.bf16.mxu0 0
    %877 = vmatpush1.bf16.msra.mxu0 %v234
    %878 = vmatprep.subr.bf16.mxu0 0
    %879 = vmatpush1.bf16.msra.mxu0 %v235
    %880 = vmatprep.subr.bf16.mxu0 0
    %881 = vmatpush1.bf16.msra.mxu0 %v236
    %882 = vmatprep.subr.bf16.mxu0 0
    %883 = vmatpush1.bf16.msra.mxu0 %v237
    %884 = vmatprep.subr.bf16.mxu0 0
    %885 = vmatpush1.bf16.msra.mxu0 %v238
    %886 = vmatprep.subr.bf16.mxu0 0
    %887 = vmatpush1.bf16.msra.mxu0 %v239
    %888 = vmatprep.subr.bf16.mxu0 0
    %889 = vmatpush1.bf16.msra.mxu0 0
    %890 = vmatprep.subr.bf16.mxu0 0
    %891 = vmatpush1.bf16.msra.mxu0 0
    %892 = vmatprep.subr.bf16.mxu0 0
    %893 = vmatpush1.bf16.msra.mxu0 0
    %894 = vmatprep.subr.bf16.mxu0 0
    %895 = vmatpush1.bf16.msra.mxu0 0
    %896 = vmatprep.subr.bf16.mxu0 0
    %897 = vmatpush1.bf16.msra.mxu0 0
    %898 = vmatprep.subr.bf16.mxu0 0
    %899 = vmatpush1.bf16.msra.mxu0 0
    %900 = vmatprep.subr.bf16.mxu0 0
    %901 = vmatpush1.bf16.msra.mxu0 0
    %902 = vmatprep.subr.bf16.mxu0 0
    %903 = vmatpush1.bf16.msra.mxu0 0
    %904 = vmatprep.mubr.bf16.mxu0 0
    %905 = vmatmul.mubr.bf16.gmra.mrb[0].mxu0 %v831
    %v906 = vpop.f32.mrb[0].mxu0
    %v907 = vadd.f32 0.0, %v906
    %v908 = vpop.f32.mrb[0].mxu0
    %v909 = vpop.f32.mrb[0].mxu0
    %v910 = vpop.f32.mrb[0].mxu0
    %911 = vdwg.mxu0
    %v912 = vadd.f32 %v157, %v907
    %v913 = vtanh.pop %v912
    %v914 = vmul.f32 %v913, %v34
    %v915 = vadd.f32 %v914, %v35
    %916 = vrot.lane.b32.xlu0 %v915, 96
    %v917 = vpop.permute.xlu0 %916
    %918 = vrot.lane.b32.xlu0 %v915, 64
    %v919 = vpop.permute.xlu0 %918
    %920 = vrot.lane.b32.xlu0 %v915, 32
    %v921 = vpop.permute.xlu0 %920
    %v922 = vmul.f32 %v917, %v828
    %v923 = vmul.f32 %v915, %v919
    %v924 = vadd.f32 %v922, %v923
    %v925 = vtanh.pop %v924
    %v926 = vmul.f32 %v921, %v925
    %v927 = vpack.c.bf16 %v926, %v926
    %928 = vmatprep.subr.bf16.mxu0 0
    %929 = vmatpush1.bf16.msra.mxu0 %v336
    %930 = vmatprep.subr.bf16.mxu0 0
    %931 = vmatpush1.bf16.msra.mxu0 %v337
    %932 = vmatprep.subr.bf16.mxu0 0
    %933 = vmatpush1.bf16.msra.mxu0 %v338
    %934 = vmatprep.subr.bf16.mxu0 0
    %935 = vmatpush1.bf16.msra.mxu0 %v339
    %936 = vmatprep.subr.bf16.mxu0 0
    %937 = vmatpush1.bf16.msra.mxu0 %v340
    %938 = vmatprep.subr.bf16.mxu0 0
    %939 = vmatpush1.bf16.msra.mxu0 %v341
    %940 = vmatprep.subr.bf16.mxu0 0
    %941 = vmatpush1.bf16.msra.mxu0 %v342
    %942 = vmatprep.subr.bf16.mxu0 0
    %943 = vmatpush1.bf16.msra.mxu0 %v343
    %944 = vmatprep.subr.bf16.mxu0 0
    %945 = vmatpush1.bf16.msra.mxu0 0
    %946 = vmatprep.subr.bf16.mxu0 0
    %947 = vmatpush1.bf16.msra.mxu0 0
    %948 = vmatprep.subr.bf16.mxu0 0
    %949 = vmatpush1.bf16.msra.mxu0 0
    %950 = vmatprep.subr.bf16.mxu0 0
    %951 = vmatpush1.bf16.msra.mxu0 0
    %952 = vmatprep.subr.bf16.mxu0 0
    %953 = vmatpush1.bf16.msra.mxu0 0
    %954 = vmatprep.subr.bf16.mxu0 0
    %955 = vmatpush1.bf16.msra.mxu0 0
    %956 = vmatprep.subr.bf16.mxu0 0
    %957 = vmatpush1.bf16.msra.mxu0 0
    %958 = vmatprep.subr.bf16.mxu0 0
    %959 = vmatpush1.bf16.msra.mxu0 0
    %960 = vmatprep.mubr.bf16.mxu0 0
    %961 = vmatmul.mubr.bf16.gmra.mrb[0].mxu0 %v927
    %v962 = vpop.f32.mrb[0].mxu0
    %v963 = vadd.f32 %v199, %v962
    %v964 = vpop.f32.mrb[0].mxu0
    %v965 = vpop.f32.mrb[0].mxu0
    %v966 = vpop.f32.mrb[0].mxu0
    %967 = vdwg.mxu0
    %968 = vmatprep.subr.bf16.mxu0 0
    %969 = vmatpush1.bf16.msra.mxu0 %v232
    %970 = vmatprep.subr.bf16.mxu0 0
    %971 = vmatpush1.bf16.msra.mxu0 %v233
    %972 = vmatprep.subr.bf16.mxu0 0
    %973 = vmatpush1.bf16.msra.mxu0 %v234
    %974 = vmatprep.subr.bf16.mxu0 0
    %975 = vmatpush1.bf16.msra.mxu0 %v235
    %976 = vmatprep.subr.bf16.mxu0 0
    %977 = vmatpush1.bf16.msra.mxu0 %v236
    %978 = vmatprep.subr.bf16.mxu0 0
    %979 = vmatpush1.bf16.msra.mxu0 %v237
    %980 = vmatprep.subr.bf16.mxu0 0
    %981 = vmatpush1.bf16.msra.mxu0 %v238
    %982 = vmatprep.subr.bf16.mxu0 0
    %983 = vmatpush1.bf16.msra.mxu0 %v239
    %984 = vmatprep.subr.bf16.mxu0 0
    %985 = vmatpush1.bf16.msra.mxu0 0
    %986 = vmatprep.subr.bf16.mxu0 0
    %987 = vmatpush1.bf16.msra.mxu0 0
    %988 = vmatprep.subr.bf16.mxu0 0
    %989 = vmatpush1.bf16.msra.mxu0 0
    %990 = vmatprep.subr.bf16.mxu0 0
    %991 = vmatpush1.bf16.msra.mxu0 0
    %992 = vmatprep.subr.bf16.mxu0 0
    %993 = vmatpush1.bf16.msra.mxu0 0
    %994 = vmatprep.subr.bf16.mxu0 0
    %995 = vmatpush1.bf16.msra.mxu0 0
    %996 = vmatprep.subr.bf16.mxu0 0
    %997 = vmatpush1.bf16.msra.mxu0 0
    %998 = vmatprep.subr.bf16.mxu0 0
    %999 = vmatpush1.bf16.msra.mxu0 0
    %1000 = vmatprep.mubr.bf16.mxu0 0
    %1001 = vmatmul.mubr.bf16.gmra.mrb[0].mxu0 %v927
    %v1002 = vpop.f32.mrb[0].mxu0
    %v1003 = vadd.f32 0.0, %v1002
    %v1004 = vpop.f32.mrb[0].mxu0
    %v1005 = vpop.f32.mrb[0].mxu0
    %v1006 = vpop.f32.mrb[0].mxu0
    %1007 = vdwg.mxu0
    %v1008 = vadd.f32 %v160, %v1003
    %v1009 = vtanh.pop %v1008
    %v1010 = vmul.f32 %v1009, %v34
    %v1011 = vadd.f32 %v1010, %v35
    %1012 = vrot.lane.b32.xlu0 %v1011, 96
    %v1013 = vpop.permute.xlu0 %1012
    %1014 = vrot.lane.b32.xlu0 %v1011, 64
    %v1015 = vpop.permute.xlu0 %1014
    %1016 = vrot.lane.b32.xlu0 %v1011, 32
    %v1017 = vpop.permute.xlu0 %1016
    %v1018 = vmul.f32 %v1013, %v924
    %v1019 = vmul.f32 %v1011, %v1015
    %v1020 = vadd.f32 %v1018, %v1019
    %v1021 = vtanh.pop %v1020
    %v1022 = vmul.f32 %v1017, %v1021
    %v1023 = vpack.c.bf16 %v1022, %v1022
    %1024 = vmatprep.subr.bf16.mxu0 0
    %1025 = vmatpush1.bf16.msra.mxu0 %v336
    %1026 = vmatprep.subr.bf16.mxu0 0
    %1027 = vmatpush1.bf16.msra.mxu0 %v337
    %1028 = vmatprep.subr.bf16.mxu0 0
    %1029 = vmatpush1.bf16.msra.mxu0 %v338
    %1030 = vmatprep.subr.bf16.mxu0 0
    %1031 = vmatpush1.bf16.msra.mxu0 %v339
    %1032 = vmatprep.subr.bf16.mxu0 0
    %1033 = vmatpush1.bf16.msra.mxu0 %v340
    %1034 = vmatprep.subr.bf16.mxu0 0
    %1035 = vmatpush1.bf16.msra.mxu0 %v341
    %1036 = vmatprep.subr.bf16.mxu0 0
    %1037 = vmatpush1.bf16.msra.mxu0 %v342
    %1038 = vmatprep.subr.bf16.mxu0 0
    %1039 = vmatpush1.bf16.msra.mxu0 %v343
    %1040 = vmatprep.subr.bf16.mxu0 0
    %1041 = vmatpush1.bf16.msra.mxu0 0
    %1042 = vmatprep.subr.bf16.mxu0 0
    %1043 = vmatpush1.bf16.msra.mxu0 0
    %1044 = vmatprep.subr.bf16.mxu0 0
    %1045 = vmatpush1.bf16.msra.mxu0 0
    %1046 = vmatprep.subr.bf16.mxu0 0
    %1047 = vmatpush1.bf16.msra.mxu0 0
    %1048 = vmatprep.subr.bf16.mxu0 0
    %1049 = vmatpush1.bf16.msra.mxu0 0
    %1050 = vmatprep.subr.bf16.mxu0 0
    %1051 = vmatpush1.bf16.msra.mxu0 0
    %1052 = vmatprep.subr.bf16.mxu0 0
    %1053 = vmatpush1.bf16.msra.mxu0 0
    %1054 = vmatprep.subr.bf16.mxu0 0
    %1055 = vmatpush1.bf16.msra.mxu0 0
    %1056 = vmatprep.mubr.bf16.mxu0 0
    %1057 = vmatmul.mubr.bf16.gmra.mrb[0].mxu0 %v1023
    %v1058 = vpop.f32.mrb[0].mxu0
    %v1059 = vadd.f32 %v199, %v1058
    %v1060 = vpop.f32.mrb[0].mxu0
    %v1061 = vpop.f32.mrb[0].mxu0
    %v1062 = vpop.f32.mrb[0].mxu0
    %1063 = vdwg.mxu0
    %v1064 = vld [vmem:[#allocation2 + $0x90] sm:$0xf]
    %v1065 = vld [vmem:[#allocation2 + $0x94] sm:$0xf]
    %v1066 = vld [vmem:[#allocation2 + $0x98] sm:$0xf]
    %v1067 = vld [vmem:[#allocation2 + $0x9c] sm:$0xf]
    %v1068 = vld [vmem:[#allocation2 + $0xa0] sm:$0xf]
    %v1069 = vld [vmem:[#allocation2 + $0xa4] sm:$0xf]
    %v1070 = vld [vmem:[#allocation2 + $0xa8] sm:$0xf]
    %v1071 = vld [vmem:[#allocation2 + $0xac] sm:$0xf]
    %v1072 = vld [vmem:[#allocation2 + $0xb0] sm:$0xf]
    %v1073 = vld [vmem:[#allocation2 + $0xb4] sm:$0xf]
    %v1074 = vld [vmem:[#allocation2 + $0xb8] sm:$0xf]
    %v1075 = vld [vmem:[#allocation2 + $0xbc] sm:$0xf]
    %v1076 = vld [vmem:[#allocation2 + $0xc0] sm:$0xf]
    %v1077 = vld [vmem:[#allocation2 + $0xc4] sm:$0xf]
    %v1078 = vld [vmem:[#allocation2 + $0xc8] sm:$0xf]
    %v1079 = vld [vmem:[#allocation2 + $0xcc] sm:$0xf]
    %v1096 = vunpack.c.l.b16 %v1064
    %v1097 = vunpack.c.l.b16 %v1065
    %v1098 = vunpack.c.l.b16 %v1066
    %v1099 = vunpack.c.l.b16 %v1067
    %v1100 = vunpack.c.l.b16 %v1068
    %v1101 = vunpack.c.l.b16 %v1069
    %v1102 = vunpack.c.l.b16 %v1070
    %v1103 = vunpack.c.l.b16 %v1071
    %v1104 = vunpack.c.l.b16 %v1072
    %v1105 = vunpack.c.l.b16 %v1073
    %v1106 = vunpack.c.l.b16 %v1074
    %v1107 = vunpack.c.l.b16 %v1075
    %v1108 = vunpack.c.l.b16 %v1076
    %v1109 = vunpack.c.l.b16 %v1077
    %v1110 = vunpack.c.l.b16 %v1078
    %v1111 = vunpack.c.l.b16 %v1079
    %v1112 = vpack.c.b16 %v1097, %v1096
    %v1113 = vpack.c.b16 %v1099, %v1098
    %v1114 = vpack.c.b16 %v1101, %v1100
    %v1115 = vpack.c.b16 %v1103, %v1102
    %v1116 = vpack.c.b16 %v1105, %v1104
    %v1117 = vpack.c.b16 %v1107, %v1106
    %v1118 = vpack.c.b16 %v1109, %v1108
    %v1119 = vpack.c.b16 %v1111, %v1110
    %1128 = vmatprep.subr.bf16.mxu0 0
    %1129 = vmatpush1.bf16.msra.mxu0 %v1112
    %1130 = vmatprep.subr.bf16.mxu0 0
    %1131 = vmatpush1.bf16.msra.mxu0 %v1113
    %1132 = vmatprep.subr.bf16.mxu0 0
    %1133 = vmatpush1.bf16.msra.mxu0 %v1114
    %1134 = vmatprep.subr.bf16.mxu0 0
    %1135 = vmatpush1.bf16.msra.mxu0 %v1115
    %1136 = vmatprep.subr.bf16.mxu0 0
    %1137 = vmatpush1.bf16.msra.mxu0 %v1116
    %1138 = vmatprep.subr.bf16.mxu0 0
    %1139 = vmatpush1.bf16.msra.mxu0 %v1117
    %1140 = vmatprep.subr.bf16.mxu0 0
    %1141 = vmatpush1.bf16.msra.mxu0 %v1118
    %1142 = vmatprep.subr.bf16.mxu0 0
    %1143 = vmatpush1.bf16.msra.mxu0 %v1119
    %1144 = vmatprep.subr.bf16.mxu0 0
    %1145 = vmatpush1.bf16.msra.mxu0 0
    %1146 = vmatprep.subr.bf16.mxu0 0
    %1147 = vmatpush1.bf16.msra.mxu0 0
    %1148 = vmatprep.subr.bf16.mxu0 0
    %1149 = vmatpush1.bf16.msra.mxu0 0
    %1150 = vmatprep.subr.bf16.mxu0 0
    %1151 = vmatpush1.bf16.msra.mxu0 0
    %1152 = vmatprep.subr.bf16.mxu0 0
    %1153 = vmatpush1.bf16.msra.mxu0 0
    %1154 = vmatprep.subr.bf16.mxu0 0
    %1155 = vmatpush1.bf16.msra.mxu0 0
    %1156 = vmatprep.subr.bf16.mxu0 0
    %1157 = vmatpush1.bf16.msra.mxu0 0
    %1158 = vmatprep.subr.bf16.mxu0 0
    %1159 = vmatpush1.bf16.msra.mxu0 0
    %1160 = vmatprep.mubr.bf16.mxu0 0
    %1161 = vmatmul.mubr.bf16.gmra.mrb[0].mxu0 0
    %v1162 = vpop.f32.mrb[0].mxu0
    %v1163 = vadd.f32 0.0, %v1162
    %v1164 = vpop.f32.mrb[0].mxu0
    %v1165 = vpop.f32.mrb[0].mxu0
    %v1166 = vpop.f32.mrb[0].mxu0
    %1167 = vdwg.mxu0
    %v1168 = vadd.f32 %v387, %v1163
    %v1169 = vtanh.pop %v1168
    %v1170 = vmul.f32 %v1169, %v34
    %v1171 = vadd.f32 %v1170, %v35
    %1172 = vrot.lane.b32.xlu0 %v1171, 96
    %v1173 = vpop.permute.xlu0 %1172
    %1174 = vrot.lane.b32.xlu0 %v1171, 64
    %v1175 = vpop.permute.xlu0 %1174
    %1176 = vrot.lane.b32.xlu0 %v1171, 32
    %v1177 = vpop.permute.xlu0 %1176
    %v1178 = vmul.f32 %v1173, 0.0
    %v1179 = vmul.f32 %v1171, %v1175
    %v1180 = vadd.f32 %v1178, %v1179
    %v1181 = vtanh.pop %v1180
    %v1182 = vmul.f32 %v1177, %v1181
    %v1183 = vpack.c.bf16 %v1182, %v1182
    %1184 = vmatprep.subr.bf16.mxu0 0
    %1185 = vmatpush1.bf16.msra.mxu0 %v1112
    %1186 = vmatprep.subr.bf16.mxu0 0
    %1187 = vmatpush1.bf16.msra.mxu0 %v1113
    %1188 = vmatprep.subr.bf16.mxu0 0
    %1189 = vmatpush1.bf16.msra.mxu0 %v1114
    %1190 = vmatprep.subr.bf16.mxu0 0
    %1191 = vmatpush1.bf16.msra.mxu0 %v1115
    %1192 = vmatprep.subr.bf16.mxu0 0
    %1193 = vmatpush1.bf16.msra.mxu0 %v1116
    %1194 = vmatprep.subr.bf16.mxu0 0
    %1195 = vmatpush1.bf16.msra.mxu0 %v1117
    %1196 = vmatprep.subr.bf16.mxu0 0
    %1197 = vmatpush1.bf16.msra.mxu0 %v1118
    %1198 = vmatprep.subr.bf16.mxu0 0
    %1199 = vmatpush1.bf16.msra.mxu0 %v1119
    %1200 = vmatprep.subr.bf16.mxu0 0
    %1201 = vmatpush1.bf16.msra.mxu0 0
    %1202 = vmatprep.subr.bf16.mxu0 0
    %1203 = vmatpush1.bf16.msra.mxu0 0
    %1204 = vmatprep.subr.bf16.mxu0 0
    %1205 = vmatpush1.bf16.msra.mxu0 0
    %1206 = vmatprep.subr.bf16.mxu0 0
    %1207 = vmatpush1.bf16.msra.mxu0 0
    %1208 = vmatprep.subr.bf16.mxu0 0
    %1209 = vmatpush1.bf16.msra.mxu0 0
    %1210 = vmatprep.subr.bf16.mxu0 0
    %1211 = vmatpush1.bf16.msra.mxu0 0
    %1212 = vmatprep.subr.bf16.mxu0 0
    %1213 = vmatpush1.bf16.msra.mxu0 0
    %1214 = vmatprep.subr.bf16.mxu0 0
    %1215 = vmatpush1.bf16.msra.mxu0 0
    %1216 = vmatprep.mubr.bf16.mxu0 0
    %1217 = vmatmul.mubr.bf16.gmra.mrb[0].mxu0 %v1183
    %v1218 = vpop.f32.mrb[0].mxu0
    %v1219 = vadd.f32 0.0, %v1218
    %v1220 = vpop.f32.mrb[0].mxu0
    %v1221 = vpop.f32.mrb[0].mxu0
    %v1222 = vpop.f32.mrb[0].mxu0
    %1223 = vdwg.mxu0
    %v1224 = vadd.f32 %v483, %v1219
    %v1225 = vtanh.pop %v1224
    %v1226 = vmul.f32 %v1225, %v34
    %v1227 = vadd.f32 %v1226, %v35
    %1228 = vrot.lane.b32.xlu0 %v1227, 96
    %v1229 = vpop.permute.xlu0 %1228
    %1230 = vrot.lane.b32.xlu0 %v1227, 64
    %v1231 = vpop.permute.xlu0 %1230
    %1232 = vrot.lane.b32.xlu0 %v1227, 32
    %v1233 = vpop.permute.xlu0 %1232
    %v1234 = vmul.f32 %v1229, %v1180
    %v1235 = vmul.f32 %v1227, %v1231
    %v1236 = vadd.f32 %v1234, %v1235
    %v1237 = vtanh.pop %v1236
    %v1238 = vmul.f32 %v1233, %v1237
    %v1239 = vpack.c.bf16 %v1238, %v1238
    %1240 = vmatprep.subr.bf16.mxu0 0
    %1241 = vmatpush1.bf16.msra.mxu0 %v1112
    %1242 = vmatprep.subr.bf16.mxu0 0
    %1243 = vmatpush1.bf16.msra.mxu0 %v1113
    %1244 = vmatprep.subr.bf16.mxu0 0
    %1245 = vmatpush1.bf16.msra.mxu0 %v1114
    %1246 = vmatprep.subr.bf16.mxu0 0
    %1247 = vmatpush1.bf16.msra.mxu0 %v1115
    %1248 = vmatprep.subr.bf16.mxu0 0
    %1249 = vmatpush1.bf16.msra.mxu0 %v1116
    %1250 = vmatprep.subr.bf16.mxu0 0
    %1251 = vmatpush1.bf16.msra.mxu0 %v1117
    %1252 = vmatprep.subr.bf16.mxu0 0
    %1253 = vmatpush1.bf16.msra.mxu0 %v1118
    %1254 = vmatprep.subr.bf16.mxu0 0
    %1255 = vmatpush1.bf16.msra.mxu0 %v1119
    %1256 = vmatprep.subr.bf16.mxu0 0
    %1257 = vmatpush1.bf16.msra.mxu0 0
    %1258 = vmatprep.subr.bf16.mxu0 0
    %1259 = vmatpush1.bf16.msra.mxu0 0
    %1260 = vmatprep.subr.bf16.mxu0 0
    %1261 = vmatpush1.bf16.msra.mxu0 0
    %1262 = vmatprep.subr.bf16.mxu0 0
    %1263 = vmatpush1.bf16.msra.mxu0 0
    %1264 = vmatprep.subr.bf16.mxu0 0
    %1265 = vmatpush1.bf16.msra.mxu0 0
    %1266 = vmatprep.subr.bf16.mxu0 0
    %1267 = vmatpush1.bf16.msra.mxu0 0
    %1268 = vmatprep.subr.bf16.mxu0 0
    %1269 = vmatpush1.bf16.msra.mxu0 0
    %1270 = vmatprep.subr.bf16.mxu0 0
    %1271 = vmatpush1.bf16.msra.mxu0 0
    %1272 = vmatprep.mubr.bf16.mxu0 0
    %1273 = vmatmul.mubr.bf16.gmra.mrb[0].mxu0 %v1239
    %v1274 = vpop.f32.mrb[0].mxu0
    %v1275 = vadd.f32 0.0, %v1274
    %v1276 = vpop.f32.mrb[0].mxu0
    %v1277 = vpop.f32.mrb[0].mxu0
    %v1278 = vpop.f32.mrb[0].mxu0
    %1279 = vdwg.mxu0
    %v1280 = vadd.f32 %v579, %v1275
    %v1281 = vtanh.pop %v1280
    %v1282 = vmul.f32 %v1281, %v34
    %v1283 = vadd.f32 %v1282, %v35
    %1284 = vrot.lane.b32.xlu0 %v1283, 96
    %v1285 = vpop.permute.xlu0 %1284
    %1286 = vrot.lane.b32.xlu0 %v1283, 64
    %v1287 = vpop.permute.xlu0 %1286
    %1288 = vrot.lane.b32.xlu0 %v1283, 32
    %v1289 = vpop.permute.xlu0 %1288
    %v1290 = vmul.f32 %v1285, %v1236
    %v1291 = vmul.f32 %v1283, %v1287
    %v1292 = vadd.f32 %v1290, %v1291
    %v1293 = vtanh.pop %v1292
    %v1294 = vmul.f32 %v1289, %v1293
    %v1295 = vpack.c.bf16 %v1294, %v1294
    %1296 = vmatprep.subr.bf16.mxu0 0
    %1297 = vmatpush1.bf16.msra.mxu0 %v1112
    %1298 = vmatprep.subr.bf16.mxu0 0
    %1299 = vmatpush1.bf16.msra.mxu0 %v1113
    %1300 = vmatprep.subr.bf16.mxu0 0
    %1301 = vmatpush1.bf16.msra.mxu0 %v1114
    %1302 = vmatprep.subr.bf16.mxu0 0
    %1303 = vmatpush1.bf16.msra.mxu0 %v1115
    %1304 = vmatprep.subr.bf16.mxu0 0
    %1305 = vmatpush1.bf16.msra.mxu0 %v1116
    %1306 = vmatprep.subr.bf16.mxu0 0
    %1307 = vmatpush1.bf16.msra.mxu0 %v1117
    %1308 = vmatprep.subr.bf16.mxu0 0
    %1309 = vmatpush1.bf16.msra.mxu0 %v1118
    %1310 = vmatprep.subr.bf16.mxu0 0
    %1311 = vmatpush1.bf16.msra.mxu0 %v1119
    %1312 = vmatprep.subr.bf16.mxu0 0
    %1313 = vmatpush1.bf16.msra.mxu0 0
    %1314 = vmatprep.subr.bf16.mxu0 0
    %1315 = vmatpush1.bf16.msra.mxu0 0
    %1316 = vmatprep.subr.bf16.mxu0 0
    %1317 = vmatpush1.bf16.msra.mxu0 0
    %1318 = vmatprep.subr.bf16.mxu0 0
    %1319 = vmatpush1.bf16.msra.mxu0 0
    %1320 = vmatprep.subr.bf16.mxu0 0
    %1321 = vmatpush1.bf16.msra.mxu0 0
    %1322 = vmatprep.subr.bf16.mxu0 0
    %1323 = vmatpush1.bf16.msra.mxu0 0
    %1324 = vmatprep.subr.bf16.mxu0 0
    %1325 = vmatpush1.bf16.msra.mxu0 0
    %1326 = vmatprep.subr.bf16.mxu0 0
    %1327 = vmatpush1.bf16.msra.mxu0 0
    %1328 = vmatprep.mubr.bf16.mxu0 0
    %1329 = vmatmul.mubr.bf16.gmra.mrb[0].mxu0 %v1295
    %v1330 = vpop.f32.mrb[0].mxu0
    %v1331 = vadd.f32 0.0, %v1330
    %v1332 = vpop.f32.mrb[0].mxu0
    %v1333 = vpop.f32.mrb[0].mxu0
    %v1334 = vpop.f32.mrb[0].mxu0
    %1335 = vdwg.mxu0
    %v1336 = vadd.f32 %v675, %v1331
    %v1337 = vtanh.pop %v1336
    %v1338 = vmul.f32 %v1337, %v34
    %v1339 = vadd.f32 %v1338, %v35
    %1340 = vrot.lane.b32.xlu0 %v1339, 96
    %v1341 = vpop.permute.xlu0 %1340
    %1342 = vrot.lane.b32.xlu0 %v1339, 64
    %v1343 = vpop.permute.xlu0 %1342
    %1344 = vrot.lane.b32.xlu0 %v1339, 32
    %v1345 = vpop.permute.xlu0 %1344
    %v1346 = vmul.f32 %v1341, %v1292
    %v1347 = vmul.f32 %v1339, %v1343
    %v1348 = vadd.f32 %v1346, %v1347
    %v1349 = vtanh.pop %v1348
    %v1350 = vmul.f32 %v1345, %v1349
    %v1351 = vpack.c.bf16 %v1350, %v1350
    %1352 = vmatprep.subr.bf16.mxu0 0
    %1353 = vmatpush1.bf16.msra.mxu0 %v1112
    %1354 = vmatprep.subr.bf16.mxu0 0
    %1355 = vmatpush1.bf16.msra.mxu0 %v1113
    %1356 = vmatprep.subr.bf16.mxu0 0
    %1357 = vmatpush1.bf16.msra.mxu0 %v1114
    %1358 = vmatprep.subr.bf16.mxu0 0
    %1359 = vmatpush1.bf16.msra.mxu0 %v1115
    %1360 = vmatprep.subr.bf16.mxu0 0
    %1361 = vmatpush1.bf16.msra.mxu0 %v1116
    %1362 = vmatprep.subr.bf16.mxu0 0
    %1363 = vmatpush1.bf16.msra.mxu0 %v1117
    %1364 = vmatprep.subr.bf16.mxu0 0
    %1365 = vmatpush1.bf16.msra.mxu0 %v1118
    %1366 = vmatprep.subr.bf16.mxu0 0
    %1367 = vmatpush1.bf16.msra.mxu0 %v1119
    %1368 = vmatprep.subr.bf16.mxu0 0
    %1369 = vmatpush1.bf16.msra.mxu0 0
    %1370 = vmatprep.subr.bf16.mxu0 0
    %1371 = vmatpush1.bf16.msra.mxu0 0
    %1372 = vmatprep.subr.bf16.mxu0 0
    %1373 = vmatpush1.bf16.msra.mxu0 0
    %1374 = vmatprep.subr.bf16.mxu0 0
    %1375 = vmatpush1.bf16.msra.mxu0 0
    %1376 = vmatprep.subr.bf16.mxu0 0
    %1377 = vmatpush1.bf16.msra.mxu0 0
    %1378 = vmatprep.subr.bf16.mxu0 0
    %1379 = vmatpush1.bf16.msra.mxu0 0
    %1380 = vmatprep.subr.bf16.mxu0 0
    %1381 = vmatpush1.bf16.msra.mxu0 0
    %1382 = vmatprep.subr.bf16.mxu0 0
    %1383 = vmatpush1.bf16.msra.mxu0 0
    %1384 = vmatprep.mubr.bf16.mxu0 0
    %1385 = vmatmul.mubr.bf16.gmra.mrb[0].mxu0 %v1351
    %v1386 = vpop.f32.mrb[0].mxu0
    %v1387 = vadd.f32 0.0, %v1386
    %v1388 = vpop.f32.mrb[0].mxu0
    %v1389 = vpop.f32.mrb[0].mxu0
    %v1390 = vpop.f32.mrb[0].mxu0
    %1391 = vdwg.mxu0
    %v1392 = vadd.f32 %v771, %v1387
    %v1393 = vtanh.pop %v1392
    %v1394 = vmul.f32 %v1393, %v34
    %v1395 = vadd.f32 %v1394, %v35
    %1396 = vrot.lane.b32.xlu0 %v1395, 96
    %v1397 = vpop.permute.xlu0 %1396
    %1398 = vrot.lane.b32.xlu0 %v1395, 64
    %v1399 = vpop.permute.xlu0 %1398
    %1400 = vrot.lane.b32.xlu0 %v1395, 32
    %v1401 = vpop.permute.xlu0 %1400
    %v1402 = vmul.f32 %v1397, %v1348
    %v1403 = vmul.f32 %v1395, %v1399
    %v1404 = vadd.f32 %v1402, %v1403
    %v1405 = vtanh.pop %v1404
    %v1406 = vmul.f32 %v1401, %v1405
    %v1407 = vpack.c.bf16 %v1406, %v1406
    %1408 = vmatprep.subr.bf16.mxu0 0
    %1409 = vmatpush1.bf16.msra.mxu0 %v1112
    %1410 = vmatprep.subr.bf16.mxu0 0
    %1411 = vmatpush1.bf16.msra.mxu0 %v1113
    %1412 = vmatprep.subr.bf16.mxu0 0
    %1413 = vmatpush1.bf16.msra.mxu0 %v1114
    %1414 = vmatprep.subr.bf16.mxu0 0
    %1415 = vmatpush1.bf16.msra.mxu0 %v1115
    %1416 = vmatprep.subr.bf16.mxu0 0
    %1417 = vmatpush1.bf16.msra.mxu0 %v1116
    %1418 = vmatprep.subr.bf16.mxu0 0
    %1419 = vmatpush1.bf16.msra.mxu0 %v1117
    %1420 = vmatprep.subr.bf16.mxu0 0
    %1421 = vmatpush1.bf16.msra.mxu0 %v1118
    %1422 = vmatprep.subr.bf16.mxu0 0
    %1423 = vmatpush1.bf16.msra.mxu0 %v1119
    %1424 = vmatprep.subr.bf16.mxu0 0
    %1425 = vmatpush1.bf16.msra.mxu0 0
    %1426 = vmatprep.subr.bf16.mxu0 0
    %1427 = vmatpush1.bf16.msra.mxu0 0
    %1428 = vmatprep.subr.bf16.mxu0 0
    %1429 = vmatpush1.bf16.msra.mxu0 0
    %1430 = vmatprep.subr.bf16.mxu0 0
    %1431 = vmatpush1.bf16.msra.mxu0 0
    %1432 = vmatprep.subr.bf16.mxu0 0
    %1433 = vmatpush1.bf16.msra.mxu0 0
    %1434 = vmatprep.subr.bf16.mxu0 0
    %1435 = vmatpush1.bf16.msra.mxu0 0
    %1436 = vmatprep.subr.bf16.mxu0 0
    %1437 = vmatpush1.bf16.msra.mxu0 0
    %1438 = vmatprep.subr.bf16.mxu0 0
    %1439 = vmatpush1.bf16.msra.mxu0 0
    %1440 = vmatprep.mubr.bf16.mxu0 0
    %1441 = vmatmul.mubr.bf16.gmra.mrb[0].mxu0 %v1407
    %v1442 = vpop.f32.mrb[0].mxu0
    %v1443 = vadd.f32 0.0, %v1442
    %v1444 = vpop.f32.mrb[0].mxu0
    %v1445 = vpop.f32.mrb[0].mxu0
    %v1446 = vpop.f32.mrb[0].mxu0
    %1447 = vdwg.mxu0
    %v1448 = vadd.f32 %v867, %v1443
    %v1449 = vtanh.pop %v1448
    %v1450 = vmul.f32 %v1449, %v34
    %v1451 = vadd.f32 %v1450, %v35
    %1452 = vrot.lane.b32.xlu0 %v1451, 96
    %v1453 = vpop.permute.xlu0 %1452
    %1454 = vrot.lane.b32.xlu0 %v1451, 64
    %v1455 = vpop.permute.xlu0 %1454
    %1456 = vrot.lane.b32.xlu0 %v1451, 32
    %v1457 = vpop.permute.xlu0 %1456
    %v1458 = vmul.f32 %v1453, %v1404
    %v1459 = vmul.f32 %v1451, %v1455
    %v1460 = vadd.f32 %v1458, %v1459
    %v1461 = vtanh.pop %v1460
    %v1462 = vmul.f32 %v1457, %v1461
    %v1463 = vpack.c.bf16 %v1462, %v1462
    %1464 = vmatprep.subr.bf16.mxu0 0
    %1465 = vmatpush1.bf16.msra.mxu0 %v1112
    %1466 = vmatprep.subr.bf16.mxu0 0
    %1467 = vmatpush1.bf16.msra.mxu0 %v1113
    %1468 = vmatprep.subr.bf16.mxu0 0
    %1469 = vmatpush1.bf16.msra.mxu0 %v1114
    %1470 = vmatprep.subr.bf16.mxu0 0
    %1471 = vmatpush1.bf16.msra.mxu0 %v1115
    %1472 = vmatprep.subr.bf16.mxu0 0
    %1473 = vmatpush1.bf16.msra.mxu0 %v1116
    %1474 = vmatprep.subr.bf16.mxu0 0
    %1475 = vmatpush1.bf16.msra.mxu0 %v1117
    %1476 = vmatprep.subr.bf16.mxu0 0
    %1477 = vmatpush1.bf16.msra.mxu0 %v1118
    %1478 = vmatprep.subr.bf16.mxu0 0
    %1479 = vmatpush1.bf16.msra.mxu0 %v1119
    %1480 = vmatprep.subr.bf16.mxu0 0
    %1481 = vmatpush1.bf16.msra.mxu0 0
    %1482 = vmatprep.subr.bf16.mxu0 0
    %1483 = vmatpush1.bf16.msra.mxu0 0
    %1484 = vmatprep.subr.bf16.mxu0 0
    %1485 = vmatpush1.bf16.msra.mxu0 0
    %1486 = vmatprep.subr.bf16.mxu0 0
    %1487 = vmatpush1.bf16.msra.mxu0 0
    %1488 = vmatprep.subr.bf16.mxu0 0
    %1489 = vmatpush1.bf16.msra.mxu0 0
    %1490 = vmatprep.subr.bf16.mxu0 0
    %1491 = vmatpush1.bf16.msra.mxu0 0
    %1492 = vmatprep.subr.bf16.mxu0 0
    %1493 = vmatpush1.bf16.msra.mxu0 0
    %1494 = vmatprep.subr.bf16.mxu0 0
    %1495 = vmatpush1.bf16.msra.mxu0 0
    %1496 = vmatprep.mubr.bf16.mxu0 0
    %1497 = vmatmul.mubr.bf16.gmra.mrb[0].mxu0 %v1463
    %v1498 = vpop.f32.mrb[0].mxu0
    %v1499 = vadd.f32 0.0, %v1498
    %v1500 = vpop.f32.mrb[0].mxu0
    %v1501 = vpop.f32.mrb[0].mxu0
    %v1502 = vpop.f32.mrb[0].mxu0
    %1503 = vdwg.mxu0
    %v1504 = vadd.f32 %v963, %v1499
    %v1505 = vtanh.pop %v1504
    %v1506 = vmul.f32 %v1505, %v34
    %v1507 = vadd.f32 %v1506, %v35
    %1508 = vrot.lane.b32.xlu0 %v1507, 96
    %v1509 = vpop.permute.xlu0 %1508
    %1510 = vrot.lane.b32.xlu0 %v1507, 64
    %v1511 = vpop.permute.xlu0 %1510
    %1512 = vrot.lane.b32.xlu0 %v1507, 32
    %v1513 = vpop.permute.xlu0 %1512
    %v1514 = vmul.f32 %v1509, %v1460
    %v1515 = vmul.f32 %v1507, %v1511
    %v1516 = vadd.f32 %v1514, %v1515
    %v1517 = vtanh.pop %v1516
    %v1518 = vmul.f32 %v1513, %v1517
    %v1519 = vpack.c.bf16 %v1518, %v1518
    %1520 = vmatprep.subr.bf16.mxu0 0
    %1521 = vmatpush1.bf16.msra.mxu0 %v1112
    %1522 = vmatprep.subr.bf16.mxu0 0
    %1523 = vmatpush1.bf16.msra.mxu0 %v1113
    %1524 = vmatprep.subr.bf16.mxu0 0
    %1525 = vmatpush1.bf16.msra.mxu0 %v1114
    %1526 = vmatprep.subr.bf16.mxu0 0
    %1527 = vmatpush1.bf16.msra.mxu0 %v1115
    %1528 = vmatprep.subr.bf16.mxu0 0
    %1529 = vmatpush1.bf16.msra.mxu0 %v1116
    %1530 = vmatprep.subr.bf16.mxu0 0
    %1531 = vmatpush1.bf16.msra.mxu0 %v1117
    %1532 = vmatprep.subr.bf16.mxu0 0
    %1533 = vmatpush1.bf16.msra.mxu0 %v1118
    %1534 = vmatprep.subr.bf16.mxu0 0
    %1535 = vmatpush1.bf16.msra.mxu0 %v1119
    %1536 = vmatprep.subr.bf16.mxu0 0
    %1537 = vmatpush1.bf16.msra.mxu0 0
    %1538 = vmatprep.subr.bf16.mxu0 0
    %1539 = vmatpush1.bf16.msra.mxu0 0
    %1540 = vmatprep.subr.bf16.mxu0 0
    %1541 = vmatpush1.bf16.msra.mxu0 0
    %1542 = vmatprep.subr.bf16.mxu0 0
    %1543 = vmatpush1.bf16.msra.mxu0 0
    %1544 = vmatprep.subr.bf16.mxu0 0
    %1545 = vmatpush1.bf16.msra.mxu0 0
    %1546 = vmatprep.subr.bf16.mxu0 0
    %1547 = vmatpush1.bf16.msra.mxu0 0
    %1548 = vmatprep.subr.bf16.mxu0 0
    %1549 = vmatpush1.bf16.msra.mxu0 0
    %1550 = vmatprep.subr.bf16.mxu0 0
    %1551 = vmatpush1.bf16.msra.mxu0 0
    %1552 = vmatprep.mubr.bf16.mxu0 0
    %1553 = vmatmul.mubr.bf16.gmra.mrb[0].mxu0 %v1519
    %v1554 = vpop.f32.mrb[0].mxu0
    %v1555 = vadd.f32 0.0, %v1554
    %v1556 = vpop.f32.mrb[0].mxu0
    %v1557 = vpop.f32.mrb[0].mxu0
    %v1558 = vpop.f32.mrb[0].mxu0
    %1559 = vdwg.mxu0
    %v1560 = vadd.f32 %v1059, %v1555
    %v1561 = vtanh.pop %v1560
    %v1562 = vmul.f32 %v1561, %v34
    %v1563 = vadd.f32 %v1562, %v35
    %1564 = vrot.lane.b32.xlu0 %v1563, 96
    %v1565 = vpop.permute.xlu0 %1564
    %1566 = vrot.lane.b32.xlu0 %v1563, 64
    %v1567 = vpop.permute.xlu0 %1566
    %1568 = vrot.lane.b32.xlu0 %v1563, 32
    %v1569 = vpop.permute.xlu0 %1568
    %v1570 = vmul.f32 %v1565, %v1516
    %v1571 = vmul.f32 %v1563, %v1567
    %v1572 = vadd.f32 %v1570, %v1571
    %v1573 = vtanh.pop %v1572
    %v1574 = vmul.f32 %v1569, %v1573
    %v1575 = vld [vmem:[#allocation2 + $0xd0] sm:$0xf]
    %v1576 = vld [vmem:[#allocation2 + $0xd4] sm:$0xf]
    %v1577 = vld [vmem:[#allocation2 + $0xd8] sm:$0xf]
    %v1578 = vld [vmem:[#allocation2 + $0xdc] sm:$0xf]
    %v1579 = vld [vmem:[#allocation2 + $0xe0] sm:$0xf]
    %v1580 = vld [vmem:[#allocation2 + $0xe4] sm:$0xf]
    %v1581 = vld [vmem:[#allocation2 + $0xe8] sm:$0xf]
    %v1582 = vld [vmem:[#allocation2 + $0xec] sm:$0xf]
    %v1583 = vld [vmem:[#allocation2 + $0xf0] sm:$0xf]
    %v1584 = vld [vmem:[#allocation2 + $0xf4] sm:$0xf]
    %v1585 = vld [vmem:[#allocation2 + $0xf8] sm:$0xf]
    %v1586 = vld [vmem:[#allocation2 + $0xfc] sm:$0xf]
    %v1587 = vld [vmem:[#allocation2 + $0x100] sm:$0xf]
    %v1588 = vld [vmem:[#allocation2 + $0x104] sm:$0xf]
    %v1589 = vld [vmem:[#allocation2 + $0x108] sm:$0xf]
    %v1590 = vld [vmem:[#allocation2 + $0x10c] sm:$0xf]
    %v1591 = vld [vmem:[%s2 + $0x2] sm:$0x1]
    %v1592 = vpack.c.bf16 %v1574, %v1574
    %v1593 = vlaneseq
    %v1594 = vshrl.u32 %v1593, 7
    %v1595 = vsub.s32 0, %v1594
    %v1596 = vrot.slane %v1591, %v1595
    %v1613 = vunpack.c.l.b16 %v1575
    %v1614 = vunpack.c.l.b16 %v1576
    %v1615 = vunpack.c.l.b16 %v1577
    %v1616 = vunpack.c.l.b16 %v1578
    %v1617 = vunpack.c.l.b16 %v1579
    %v1618 = vunpack.c.l.b16 %v1580
    %v1619 = vunpack.c.l.b16 %v1581
    %v1620 = vunpack.c.l.b16 %v1582
    %v1621 = vunpack.c.l.b16 %v1583
    %v1622 = vunpack.c.l.b16 %v1584
    %v1623 = vunpack.c.l.b16 %v1585
    %v1624 = vunpack.c.l.b16 %v1586
    %v1625 = vunpack.c.l.b16 %v1587
    %v1626 = vunpack.c.l.b16 %v1588
    %v1627 = vunpack.c.l.b16 %v1589
    %v1628 = vunpack.c.l.b16 %v1590
    %v1629 = vpack.c.b16 %v1614, %v1613
    %v1630 = vpack.c.b16 %v1616, %v1615
    %v1631 = vpack.c.b16 %v1618, %v1617
    %v1632 = vpack.c.b16 %v1620, %v1619
    %v1633 = vpack.c.b16 %v1622, %v1621
    %v1634 = vpack.c.b16 %v1624, %v1623
    %v1635 = vpack.c.b16 %v1626, %v1625
    %v1636 = vpack.c.b16 %v1628, %v1627
    %1645 = vmatprep.subr.bf16.mxu0 0
    %1646 = vmatpush1.bf16.msra.mxu0 %v1629
    %1647 = vmatprep.subr.bf16.mxu0 0
    %1648 = vmatpush1.bf16.msra.mxu0 %v1630
    %1649 = vmatprep.subr.bf16.mxu0 0
    %1650 = vmatpush1.bf16.msra.mxu0 %v1631
    %1651 = vmatprep.subr.bf16.mxu0 0
    %1652 = vmatpush1.bf16.msra.mxu0 %v1632
    %1653 = vmatprep.subr.bf16.mxu0 0
    %1654 = vmatpush1.bf16.msra.mxu0 %v1633
    %1655 = vmatprep.subr.bf16.mxu0 0
    %1656 = vmatpush1.bf16.msra.mxu0 %v1634
    %1657 = vmatprep.subr.bf16.mxu0 0
    %1658 = vmatpush1.bf16.msra.mxu0 %v1635
    %1659 = vmatprep.subr.bf16.mxu0 0
    %1660 = vmatpush1.bf16.msra.mxu0 %v1636
    %1661 = vmatprep.subr.bf16.mxu0 0
    %1662 = vmatpush1.bf16.msra.mxu0 0
    %1663 = vmatprep.subr.bf16.mxu0 0
    %1664 = vmatpush1.bf16.msra.mxu0 0
    %1665 = vmatprep.subr.bf16.mxu0 0
    %1666 = vmatpush1.bf16.msra.mxu0 0
    %1667 = vmatprep.subr.bf16.mxu0 0
    %1668 = vmatpush1.bf16.msra.mxu0 0
    %1669 = vmatprep.subr.bf16.mxu0 0
    %1670 = vmatpush1.bf16.msra.mxu0 0
    %1671 = vmatprep.subr.bf16.mxu0 0
    %1672 = vmatpush1.bf16.msra.mxu0 0
    %1673 = vmatprep.subr.bf16.mxu0 0
    %1674 = vmatpush1.bf16.msra.mxu0 0
    %1675 = vmatprep.subr.bf16.mxu0 0
    %1676 = vmatpush1.bf16.msra.mxu0 0
    %1677 = vmatprep.mubr.bf16.mxu0 0
    %1678 = vmatmul.mubr.bf16.gmra.mrb[0].mxu0 %v1592
    %v1679 = vpop.f32.mrb[0].mxu0
    %v1680 = vadd.f32 %v1596, %v1679
    %v1681 = vpop.f32.mrb[0].mxu0
    %v1682 = vpop.f32.mrb[0].mxu0
    %v1683 = vpop.f32.mrb[0].mxu0
    %1684 = vdwg.mxu0
    %vm1685 = vcmp.gt.f32.partialorder %v1680, 0.0
    %v1686 = vmul.f32 %v1680, 0.01
    %v1687 = vsel %vm1685, %v1680, %v1686
    %v1688 = vld [vmem:[#allocation2 + $0x110] sm:$0xf]
    %v1689 = vld [vmem:[#allocation2 + $0x114] sm:$0xf]
    %v1690 = vld [vmem:[#allocation2 + $0x118] sm:$0xf]
    %v1691 = vld [vmem:[#allocation2 + $0x11c] sm:$0xf]
    %v1692 = vld [vmem:[#allocation2 + $0x120] sm:$0xf]
    %v1693 = vld [vmem:[#allocation2 + $0x124] sm:$0xf]
    %v1694 = vld [vmem:[#allocation2 + $0x128] sm:$0xf]
    %v1695 = vld [vmem:[#allocation2 + $0x12c] sm:$0xf]
    %v1696 = vld [vmem:[#allocation2 + $0x130] sm:$0xf]
    %v1697 = vld [vmem:[#allocation2 + $0x134] sm:$0xf]
    %v1698 = vld [vmem:[#allocation2 + $0x138] sm:$0xf]
    %v1699 = vld [vmem:[#allocation2 + $0x13c] sm:$0xf]
    %v1700 = vld [vmem:[#allocation2 + $0x140] sm:$0xf]
    %v1701 = vld [vmem:[#allocation2 + $0x144] sm:$0xf]
    %v1702 = vld [vmem:[#allocation2 + $0x148] sm:$0xf]
    %v1703 = vld [vmem:[#allocation2 + $0x14c] sm:$0xf]
    %v1704 = vld [vmem:[%s2 + $0x3] sm:$0x1]
    %v1705 = vpack.c.bf16 %v1687, %v1687
    %v1706 = vlaneseq
    %v1707 = vshrl.u32 %v1706, 7
    %v1708 = vsub.s32 0, %v1707
    %v1709 = vrot.slane %v1704, %v1708
    %v1726 = vunpack.c.l.b16 %v1688
    %v1727 = vunpack.c.l.b16 %v1689
    %v1728 = vunpack.c.l.b16 %v1690
    %v1729 = vunpack.c.l.b16 %v1691
    %v1730 = vunpack.c.l.b16 %v1692
    %v1731 = vunpack.c.l.b16 %v1693
    %v1732 = vunpack.c.l.b16 %v1694
    %v1733 = vunpack.c.l.b16 %v1695
    %v1734 = vunpack.c.l.b16 %v1696
    %v1735 = vunpack.c.l.b16 %v1697
    %v1736 = vunpack.c.l.b16 %v1698
    %v1737 = vunpack.c.l.b16 %v1699
    %v1738 = vunpack.c.l.b16 %v1700
    %v1739 = vunpack.c.l.b16 %v1701
    %v1740 = vunpack.c.l.b16 %v1702
    %v1741 = vunpack.c.l.b16 %v1703
    %v1742 = vpack.c.b16 %v1727, %v1726
    %v1743 = vpack.c.b16 %v1729, %v1728
    %v1744 = vpack.c.b16 %v1731, %v1730
    %v1745 = vpack.c.b16 %v1733, %v1732
    %v1746 = vpack.c.b16 %v1735, %v1734
    %v1747 = vpack.c.b16 %v1737, %v1736
    %v1748 = vpack.c.b16 %v1739, %v1738
    %v1749 = vpack.c.b16 %v1741, %v1740
    %1758 = vmatprep.subr.bf16.mxu0 0
    %1759 = vmatpush1.bf16.msra.mxu0 %v1742
    %1760 = vmatprep.subr.bf16.mxu0 0
    %1761 = vmatpush1.bf16.msra.mxu0 %v1743
    %1762 = vmatprep.subr.bf16.mxu0 0
    %1763 = vmatpush1.bf16.msra.mxu0 %v1744
    %1764 = vmatprep.subr.bf16.mxu0 0
    %1765 = vmatpush1.bf16.msra.mxu0 %v1745
    %1766 = vmatprep.subr.bf16.mxu0 0
    %1767 = vmatpush1.bf16.msra.mxu0 %v1746
    %1768 = vmatprep.subr.bf16.mxu0 0
    %1769 = vmatpush1.bf16.msra.mxu0 %v1747
    %1770 = vmatprep.subr.bf16.mxu0 0
    %1771 = vmatpush1.bf16.msra.mxu0 %v1748
    %1772 = vmatprep.subr.bf16.mxu0 0
    %1773 = vmatpush1.bf16.msra.mxu0 %v1749
    %1774 = vmatprep.subr.bf16.mxu0 0
    %1775 = vmatpush1.bf16.msra.mxu0 0
    %1776 = vmatprep.subr.bf16.mxu0 0
    %1777 = vmatpush1.bf16.msra.mxu0 0
    %1778 = vmatprep.subr.bf16.mxu0 0
    %1779 = vmatpush1.bf16.msra.mxu0 0
    %1780 = vmatprep.subr.bf16.mxu0 0
    %1781 = vmatpush1.bf16.msra.mxu0 0
    %1782 = vmatprep.subr.bf16.mxu0 0
    %1783 = vmatpush1.bf16.msra.mxu0 0
    %1784 = vmatprep.subr.bf16.mxu0 0
    %1785 = vmatpush1.bf16.msra.mxu0 0
    %1786 = vmatprep.subr.bf16.mxu0 0
    %1787 = vmatpush1.bf16.msra.mxu0 0
    %1788 = vmatprep.subr.bf16.mxu0 0
    %1789 = vmatpush1.bf16.msra.mxu0 0
    %1790 = vmatprep.mubr.bf16.mxu0 0
    %1791 = vmatmul.mubr.bf16.gmra.mrb[0].mxu0 %v1705
    %v1792 = vpop.f32.mrb[0].mxu0
    %v1793 = vadd.f32 %v1709, %v1792
    %v1794 = vpop.f32.mrb[0].mxu0
    %v1795 = vpop.f32.mrb[0].mxu0
    %v1796 = vpop.f32.mrb[0].mxu0
    %1797 = vdwg.mxu0
    %vm1798 = vcmp.gt.f32.partialorder %v1793, 0.0
    %v1799 = vmul.f32 %v1793, 0.01
    %v1800 = vsel %vm1798, %v1793, %v1799
    %v1801 = vld [vmem:[#allocation2 + $0x150] sm:$0xf]
    %v1802 = vld [vmem:[#allocation2 + $0x154] sm:$0xf]
    %v1803 = vld [vmem:[#allocation2 + $0x158] sm:$0xf]
    %v1804 = vld [vmem:[#allocation2 + $0x15c] sm:$0xf]
    %v1805 = vld [vmem:[#allocation2 + $0x160] sm:$0xf]
    %v1806 = vld [vmem:[#allocation2 + $0x164] sm:$0xf]
    %v1807 = vld [vmem:[#allocation2 + $0x168] sm:$0xf]
    %v1808 = vld [vmem:[#allocation2 + $0x16c] sm:$0xf]
    %v1809 = vld [vmem:[#allocation2 + $0x170] sm:$0xf]
    %v1810 = vld [vmem:[#allocation2 + $0x174] sm:$0xf]
    %v1811 = vld [vmem:[#allocation2 + $0x178] sm:$0xf]
    %v1812 = vld [vmem:[#allocation2 + $0x17c] sm:$0xf]
    %v1813 = vld [vmem:[#allocation2 + $0x180] sm:$0xf]
    %v1814 = vld [vmem:[#allocation2 + $0x184] sm:$0xf]
    %v1815 = vld [vmem:[#allocation2 + $0x188] sm:$0xf]
    %v1816 = vld [vmem:[#allocation2 + $0x18c] sm:$0xf]
    %v1817 = vld [vmem:[%s2 + $0x4] sm:$0x1]
    %v1818 = vpack.c.bf16 %v1800, %v1800
    %v1819 = vlaneseq
    %v1820 = vshrl.u32 %v1819, 7
    %v1821 = vsub.s32 0, %v1820
    %v1822 = vrot.slane %v1817, %v1821
    %v1839 = vunpack.c.l.b16 %v1801
    %v1840 = vunpack.c.l.b16 %v1802
    %v1841 = vunpack.c.l.b16 %v1803
    %v1842 = vunpack.c.l.b16 %v1804
    %v1843 = vunpack.c.l.b16 %v1805
    %v1844 = vunpack.c.l.b16 %v1806
    %v1845 = vunpack.c.l.b16 %v1807
    %v1846 = vunpack.c.l.b16 %v1808
    %v1847 = vunpack.c.l.b16 %v1809
    %v1848 = vunpack.c.l.b16 %v1810
    %v1849 = vunpack.c.l.b16 %v1811
    %v1850 = vunpack.c.l.b16 %v1812
    %v1851 = vunpack.c.l.b16 %v1813
    %v1852 = vunpack.c.l.b16 %v1814
    %v1853 = vunpack.c.l.b16 %v1815
    %v1854 = vunpack.c.l.b16 %v1816
    %v1855 = vpack.c.b16 %v1840, %v1839
    %v1856 = vpack.c.b16 %v1842, %v1841
    %v1857 = vpack.c.b16 %v1844, %v1843
    %v1858 = vpack.c.b16 %v1846, %v1845
    %v1859 = vpack.c.b16 %v1848, %v1847
    %v1860 = vpack.c.b16 %v1850, %v1849
    %v1861 = vpack.c.b16 %v1852, %v1851
    %v1862 = vpack.c.b16 %v1854, %v1853
    %1871 = vmatprep.subr.bf16.mxu0 0
    %1872 = vmatpush1.bf16.msra.mxu0 %v1855
    %1873 = vmatprep.subr.bf16.mxu0 0
    %1874 = vmatpush1.bf16.msra.mxu0 %v1856
    %1875 = vmatprep.subr.bf16.mxu0 0
    %1876 = vmatpush1.bf16.msra.mxu0 %v1857
    %1877 = vmatprep.subr.bf16.mxu0 0
    %1878 = vmatpush1.bf16.msra.mxu0 %v1858
    %1879 = vmatprep.subr.bf16.mxu0 0
    %1880 = vmatpush1.bf16.msra.mxu0 %v1859
    %1881 = vmatprep.subr.bf16.mxu0 0
    %1882 = vmatpush1.bf16.msra.mxu0 %v1860
    %1883 = vmatprep.subr.bf16.mxu0 0
    %1884 = vmatpush1.bf16.msra.mxu0 %v1861
    %1885 = vmatprep.subr.bf16.mxu0 0
    %1886 = vmatpush1.bf16.msra.mxu0 %v1862
    %1887 = vmatprep.subr.bf16.mxu0 0
    %1888 = vmatpush1.bf16.msra.mxu0 0
    %1889 = vmatprep.subr.bf16.mxu0 0
    %1890 = vmatpush1.bf16.msra.mxu0 0
    %1891 = vmatprep.subr.bf16.mxu0 0
    %1892 = vmatpush1.bf16.msra.mxu0 0
    %1893 = vmatprep.subr.bf16.mxu0 0
    %1894 = vmatpush1.bf16.msra.mxu0 0
    %1895 = vmatprep.subr.bf16.mxu0 0
    %1896 = vmatpush1.bf16.msra.mxu0 0
    %1897 = vmatprep.subr.bf16.mxu0 0
    %1898 = vmatpush1.bf16.msra.mxu0 0
    %1899 = vmatprep.subr.bf16.mxu0 0
    %1900 = vmatpush1.bf16.msra.mxu0 0
    %1901 = vmatprep.subr.bf16.mxu0 0
    %1902 = vmatpush1.bf16.msra.mxu0 0
    %1903 = vmatprep.mubr.bf16.mxu0 0
    %1904 = vmatmul.mubr.bf16.gmra.mrb[0].mxu0 %v1818
    %v1905 = vpop.f32.mrb[0].mxu0
    %v1906 = vadd.f32 %v1822, %v1905
    %v1907 = vpop.f32.mrb[0].mxu0
    %v1908 = vpop.f32.mrb[0].mxu0
    %v1909 = vpop.f32.mrb[0].mxu0
    %1910 = vdwg.mxu0
    %1911 = vst [vmem:[%s3] sm:$0xff] %v1906
    // Predicated region
    $region18: #{coupled_lstm_forward.1} parent=1 // pred_check
      _
    $region19: #{coupled_lstm_forward.1} parent=1 // pred_check_branch
      %1913 = sbr.rel (0) target = $region21
    $region20: #{coupled_lstm_forward.1} parent=1 // pred_region
      _
    $region21: #{coupled_lstm_forward.1} parent=1 // pred_fallthru
      _
    // Predicated region
    $region22: #{coupled_lstm_forward.1} parent=1 // pred_check
      _
    $region23: #{coupled_lstm_forward.1} parent=1 // pred_check_branch
      %1915 = sbr.rel (0) target = $region25
    $region24: #{coupled_lstm_forward.1} parent=1 // pred_region
      _
    $region25: #{coupled_lstm_forward.1} parent=1 // pred_fallthru
      _
    %1916 = vsyncpa [#allocation3], 1

</llo_original>
